<compile_context>
chip_gen: v5e
topology: v5e:2x2
jax: 0.10.0
libtpu: 0.0.40
codegen_flags: <defaults>
</compile_context>

<pallas_src>
import math

import jax
import jax.numpy as jnp
from jax.experimental import pallas as pl
from jax.experimental.pallas import tpu as pltpu


def _round_up(x, m):
    return ((x + m - 1) // m) * m


def _choose_batch_tile(B):
    """Pick (TB, BP): tile rows and padded batch.

    Small batches -> single tile (rounded to sublane multiple of 8).
    Large batches -> ~512-row tiles with >= 2 grid steps so the 'parallel'
    axis can shard across both TensorCores on v7x, with minimal padding.
    """
    b8 = _round_up(B, 8)
    if b8 <= 512:
        return b8, b8
    n_tiles = max(2, -(-b8 // 512))            # ceil(b8 / 512), at least 2
    tb = _round_up(-(-b8 // n_tiles), 8)       # ceil(b8 / n_tiles), sublane aligned
    bp = _round_up(b8, tb)
    return tb, bp


def _decoder_kernel(z_ref, w1_ref, b1_ref, w2_ref, b2_ref, out_ref):
    # z_ref : (TB, LP)  bf16     w1_ref: (LP, 512) bf16   b1_ref: (1, 512) f32
    # w2_ref: (512, NP) bf16     b2_ref: (1, NP)   f32    out_ref:(TB, 784) f32
    h = jnp.dot(z_ref[...], w1_ref[...], preferred_element_type=jnp.float32)
    h = jnp.maximum(h + b1_ref[...], 0.0)                          # ReLU, f32

    y = jnp.dot(h.astype(jnp.bfloat16), w2_ref[...],
                preferred_element_type=jnp.float32) + b2_ref[...]  # (TB, NP) f32

    n_out = out_ref.shape[1]                                       # 784 (prefix slice)
    # sigmoid(y) = 0.5 * (tanh(y/2) + 1)  -- single EUP transcendental per elem.
    out_ref[...] = 0.5 * jnp.tanh(0.5 * y[:, :n_out]) + 0.5


def prepare_params(params):
    """One-time pad + cast of the weights into the kernel's lane-dense layout.

    Call this once (outside the hot path); the padded bf16/f32 params are reused
    by every forward call, so no per-call pad/cast HBM traffic remains.
    """
    w1, b1, w2, b2 = params            # w1:(L,512) b1:(1,512) w2:(512,784) b2:(1,784)
    L, H = w1.shape
    N = w2.shape[1]
    assert N == 784, f"expected 784 output features, got {N}"

    LP = _round_up(L, 128)             # lane-dense latent dim
    NP = _round_up(N, 128)             # 896: lane-dense MXU output dim

    w1_p = jnp.zeros((LP, H), jnp.bfloat16).at[:L, :].set(w1.astype(jnp.bfloat16))
    w2_p = jnp.zeros((H, NP), jnp.bfloat16).at[:, :N].set(w2.astype(jnp.bfloat16))
    b1_p = b1.reshape(1, H).astype(jnp.float32)
    b2_p = jnp.zeros((1, NP), jnp.float32).at[:, :N].set(
        b2.reshape(1, N).astype(jnp.float32))
    return (w1_p, b1_p, w2_p, b2_p)


@jax.jit
def decoder_dense(z, prepared_params):
    """z: (B, latent_dims) float32. Returns (B, 1, 28, 28) float32."""
    w1_p, b1_p, w2_p, b2_p = prepared_params
    B, L = z.shape
    LP, H = w1_p.shape
    NP = w2_p.shape[1]
    N = 784

    TB, BP = _choose_batch_tile(B)

    # Only the activations are padded per call (zero-padded latent columns and
    # batch rows don't affect the live outputs).
    z_p = jnp.zeros((BP, LP), jnp.bfloat16).at[:B, :L].set(z.astype(jnp.bfloat16))

    out = pl.pallas_call(
        _decoder_kernel,
        out_shape=jax.ShapeDtypeStruct((BP, N), jnp.float32),
        grid=(BP // TB,),
        in_specs=[
            pl.BlockSpec((TB, LP), lambda i: (i, 0)),   # z tile (per grid step)
            pl.BlockSpec((LP, H), lambda i: (0, 0)),    # w1 (VMEM resident)
            pl.BlockSpec((1, H), lambda i: (0, 0)),     # b1
            pl.BlockSpec((H, NP), lambda i: (0, 0)),    # w2 (VMEM resident)
            pl.BlockSpec((1, NP), lambda i: (0, 0)),    # b2
        ],
        out_specs=pl.BlockSpec((TB, N), lambda i: (i, 0)),  # un-padded 784 feature dim
        compiler_params=pltpu.CompilerParams(
            dimension_semantics=("parallel",)),
    )(z_p, w1_p, b1_p, w2_p, b2_p)

    return out[:B].reshape(B, 1, 28, 28)


def init_params(key, latent_dims):
    """nn.Linear-style U(-1/sqrt(fan_in), 1/sqrt(fan_in)) init.
    Weights stored as (in, out) so the kernel computes x @ W + b."""
    ks = jax.random.split(key, 4)

    def linear(kw, kb, fan_in, fan_out):
        bound = 1.0 / math.sqrt(fan_in)
        w = jax.random.uniform(kw, (fan_in, fan_out), jnp.float32, -bound, bound)
        b = jax.random.uniform(kb, (1, fan_out), jnp.float32, -bound, bound)
        return w, b

    w1, b1 = linear(ks[0], ks[1], latent_dims, 512)
    w2, b2 = linear(ks[2], ks[3], 512, 784)
    return (w1, b1, w2, b2)


if __name__ == "__main__":
    key = jax.random.PRNGKey(0)
    k_z, k_p = jax.random.split(key)

    B = 2
    latent_dims = 8

    z = jax.random.normal(k_z, (B, latent_dims), dtype=jnp.float32)
    params = init_params(k_p, latent_dims)
    prepared = prepare_params(params)   # one-time pad/cast (hoisted off hot path)

    out = decoder_dense(z, prepared)
    jax.block_until_ready(out)
    assert out.shape == (B, 1, 28, 28)

    # Pure-JAX reference (same bf16-rounded operands, f32 accumulation).
    w1, b1, w2, b2 = params
    bf = lambda a: a.astype(jnp.bfloat16).astype(jnp.float32)
    h_ref = jnp.maximum(
        jnp.dot(bf(z), bf(w1), precision=jax.lax.Precision.HIGHEST) + b1, 0.0)
    y_ref = jnp.dot(bf(h_ref), bf(w2), precision=jax.lax.Precision.HIGHEST) + b2
    out_ref = (1.0 / (1.0 + jnp.exp(-y_ref))).reshape(B, 1, 28, 28)

    assert jnp.allclose(out, out_ref, atol=2e-3, rtol=2e-3), (
        float(jnp.max(jnp.abs(out - out_ref))))

    print("KERNEL_OK")
</pallas_src>

<mosaic_0001>
module attributes {stable_mosaic.version = 11 : i64} {
  func.func @_decoder_kernel(%arg0: i32, %arg1: memref<8x128xbf16, #tpu.memory_space<vmem>>, %arg2: memref<128x512xbf16, #tpu.memory_space<vmem>>, %arg3: memref<1x512xf32, #tpu.memory_space<vmem>>, %arg4: memref<512x896xbf16, #tpu.memory_space<vmem>>, %arg5: memref<1x896xf32, #tpu.memory_space<vmem>>, %arg6: memref<8x784xf32, #tpu.memory_space<vmem>>) attributes {dimension_semantics = [#tpu.dimension_semantics<parallel>], iteration_bounds = array<i64: 1>, scalar_prefetch = 0 : i64, scratch_operands = 0 : i64, tpu.core_type = #tpu.core_type<tc>, window_params = [{transform_indices = @transform_0, window_bounds = array<i64: 8, 128>}, {pipeline_mode = #tpu.pipeline_mode<synchronous>, transform_indices = @transform_1, window_bounds = array<i64: 128, 512>}, {pipeline_mode = #tpu.pipeline_mode<synchronous>, transform_indices = @transform_2, window_bounds = array<i64: 1, 512>}, {pipeline_mode = #tpu.pipeline_mode<synchronous>, transform_indices = @transform_3, window_bounds = array<i64: 512, 896>}, {pipeline_mode = #tpu.pipeline_mode<synchronous>, transform_indices = @transform_4, window_bounds = array<i64: 1, 896>}, {transform_indices = @transform_5, window_bounds = array<i64: 8, 784>}]} {
    %c0 = arith.constant 0 : index
    %c0_0 = arith.constant 0 : index
    %0 = vector.load %arg1[%c0, %c0_0] : memref<8x128xbf16, #tpu.memory_space<vmem>>, vector<8x128xbf16>
    %c0_1 = arith.constant 0 : index
    %c0_2 = arith.constant 0 : index
    %1 = vector.load %arg2[%c0_1, %c0_2] : memref<128x512xbf16, #tpu.memory_space<vmem>>, vector<128x512xbf16>
    %cst = arith.constant dense<0.000000e+00> : vector<8x512xf32>
    %2 = tpu.matmul %0, %1, %cst {dimension_numbers = #tpu.dot_dimension_numbers<[1], [0], [0], [1], [0, 0, 1, 1], [], []>} : vector<8x128xbf16>, vector<128x512xbf16>, vector<8x512xf32> -> vector<8x512xf32>
    %c0_3 = arith.constant 0 : index
    %c0_4 = arith.constant 0 : index
    %3 = vector.load %arg3[%c0_3, %c0_4] : memref<1x512xf32, #tpu.memory_space<vmem>>, vector<1x512xf32>
    %4 = vector.broadcast %3 : vector<1x512xf32> to vector<8x512xf32>
    %5 = arith.addf %2, %4 : vector<8x512xf32>
    %cst_5 = arith.constant 0.000000e+00 : f32
    %6 = vector.broadcast %cst_5 : f32 to vector<8x512xf32>
    %7 = arith.maximumf %5, %6 : vector<8x512xf32>
    %8 = arith.truncf %7 : vector<8x512xf32> to vector<8x512xbf16>
    %c0_6 = arith.constant 0 : index
    %c0_7 = arith.constant 0 : index
    %9 = vector.load %arg4[%c0_6, %c0_7] : memref<512x896xbf16, #tpu.memory_space<vmem>>, vector<512x896xbf16>
    %cst_8 = arith.constant dense<0.000000e+00> : vector<8x896xf32>
    %10 = tpu.matmul %8, %9, %cst_8 {dimension_numbers = #tpu.dot_dimension_numbers<[1], [0], [0], [1], [0, 0, 1, 1], [], []>} : vector<8x512xbf16>, vector<512x896xbf16>, vector<8x896xf32> -> vector<8x896xf32>
    %c0_9 = arith.constant 0 : index
    %c0_10 = arith.constant 0 : index
    %11 = vector.load %arg5[%c0_9, %c0_10] : memref<1x896xf32, #tpu.memory_space<vmem>>, vector<1x896xf32>
    %12 = vector.broadcast %11 : vector<1x896xf32> to vector<8x896xf32>
    %13 = arith.addf %10, %12 : vector<8x896xf32>
    %14 = vector.extract_strided_slice %13 {offsets = [0, 0], sizes = [8, 784], strides = [1, 1]} : vector<8x896xf32> to vector<8x784xf32>
    %cst_11 = arith.constant 5.000000e-01 : f32
    %15 = vector.broadcast %cst_11 : f32 to vector<8x784xf32>
    %16 = arith.mulf %15, %14 : vector<8x784xf32>
    %17 = math.tanh %16 : vector<8x784xf32>
    %cst_12 = arith.constant 5.000000e-01 : f32
    %18 = vector.broadcast %cst_12 : f32 to vector<8x784xf32>
    %19 = arith.mulf %18, %17 : vector<8x784xf32>
    %cst_13 = arith.constant 5.000000e-01 : f32
    %20 = vector.broadcast %cst_13 : f32 to vector<8x784xf32>
    %21 = arith.addf %19, %20 : vector<8x784xf32>
    %c0_14 = arith.constant 0 : index
    %c0_15 = arith.constant 0 : index
    %22 = vector.load %arg6[%c0_14, %c0_15] : memref<8x784xf32, #tpu.memory_space<vmem>>, vector<8x784xf32>
    tpu.vector_store %arg6[%c0_14, %c0_15], %21 {strides = array<i32>} : memref<8x784xf32, #tpu.memory_space<vmem>>, vector<8x784xf32>,
    return
  }
  func.func @transform_0(%arg0: i32) -> (i32, i32) {
    %c0_i32 = arith.constant 0 : i32
    %c0_i32_0 = arith.constant 0 : i32
    return %arg0, %c0_i32 : i32, i32
  }
  func.func @transform_1(%arg0: i32) -> (i32, i32) {
    %c0_i32 = arith.constant 0 : i32
    %c0_i32_0 = arith.constant 0 : i32
    %c0_i32_1 = arith.constant 0 : i32
    return %c0_i32, %c0_i32_0 : i32, i32
  }
  func.func @transform_2(%arg0: i32) -> (i32, i32) {
    %c0_i32 = arith.constant 0 : i32
    %c0_i32_0 = arith.constant 0 : i32
    %c0_i32_1 = arith.constant 0 : i32
    return %c0_i32, %c0_i32_0 : i32, i32
  }
  func.func @transform_3(%arg0: i32) -> (i32, i32) {
    %c0_i32 = arith.constant 0 : i32
    %c0_i32_0 = arith.constant 0 : i32
    %c0_i32_1 = arith.constant 0 : i32
    return %c0_i32, %c0_i32_0 : i32, i32
  }
  func.func @transform_4(%arg0: i32) -> (i32, i32) {
    %c0_i32 = arith.constant 0 : i32
    %c0_i32_0 = arith.constant 0 : i32
    %c0_i32_1 = arith.constant 0 : i32
    return %c0_i32, %c0_i32_0 : i32, i32
  }
  func.func @transform_5(%arg0: i32) -> (i32, i32) {
    %c0_i32 = arith.constant 0 : i32
    %c0_i32_0 = arith.constant 0 : i32
    return %arg0, %c0_i32 : i32, i32
  }
}

</mosaic_0001>

<llo_original>
// kernel: decoder_dense.1
$region0: #{decoder_dense.1}
  #allocation0 [shape = 'u32[]', space=smem, size = 0x4, offset = 0x4, fixed_abs, tag = 'smem constant byte address 0x4 - core index']
  #allocation1 [shape = 'u32[72,128]{1,0:T(1,128)}', space=vmem, size = 0x9000, scoped, tag = 'internal scratch']
  %s0 = inlined_call_operand.vmem [shape: bf16[8,128], index: 0, kind: input, shape index: {}]
  %s1 = inlined_call_operand.hbm [shape: bf16[128,512], index: 1, kind: input, shape index: {}]
  %s2 = inlined_call_operand.vmem [shape: f32[1,512], index: 2, kind: input, shape index: {}]
  %s3 = inlined_call_operand.hbm [shape: bf16[512,896], index: 3, kind: input, shape index: {}]
  %s4 = inlined_call_operand.vmem [shape: f32[1,896], index: 4, kind: input, shape index: {}]
  %s5 = inlined_call_operand.vmem [shape: f32[8,784], index: 5, kind: output, shape index: {}]
  %s6 = sld [smem:[#allocation0]]
  $region38: #{decoder_dense.1} parent=0
    _
  %s8 = ssub.s32 1, %s6
  %s9 = scalar_select 0, %s8, %s6
  $region1: #{decoder_dense.1} parent=0
    #allocation2 [shape = 'u8[131072]{0}', space=vmem, size = 0x20000, scoped, tag = 'input window, operand 1, single buffered']
    #allocation3 [shape = 's32[1]{0}', space=sflag, size = 0x4, scoped, tag = 'scoped memory for decoder_dense.1']
    #allocation4 [shape = 'u8[917504]{0}', space=vmem, size = 0xe0000, scoped, tag = 'input window, operand 3, single buffered']
    #allocation5 [shape = 's32[1]{0}', space=sflag, size = 0x4, scoped, tag = 'scoped memory for decoder_dense.1']
    %10 = vsyncpa [#allocation3], 0
    %11 = vsyncpa [#allocation5], 0
    // Predicated region
    $region2: #{decoder_dense.1} parent=1 // pred_check
      _
    $region3: #{decoder_dense.1} parent=1 // pred_check_branch
      %13 = sbr.rel (0) target = $region5
    $region4: #{decoder_dense.1} parent=1 // pred_region
      _
    $region5: #{decoder_dense.1} parent=1 // pred_fallthru
      _
    // Predicated region
    $region6: #{decoder_dense.1} parent=1 // pred_check
      _
    $region7: #{decoder_dense.1} parent=1 // pred_check_branch
      %15 = sbr.rel (0) target = $region9
    $region8: #{decoder_dense.1} parent=1 // pred_region
      %17 = vsyncadd [#allocation3], 0
      %s18 = sshll.u32 %s1, 4
      %s19 = int_to_ptr.hbm [resolvable:$true] %s18
      %s20 = sshll.u32 [#allocation2], 4
      %s21 = int_to_ptr.vmem [resolvable:$true] %s20
      %26 = dma.hbm_to_vmem [thread:$0]  %s19, 4096, %s21, [#allocation3], 256, 256, 16
    $region9: #{decoder_dense.1} parent=1 // pred_fallthru
      _
    // Predicated region
    $region10: #{decoder_dense.1} parent=1 // pred_check
      _
    $region11: #{decoder_dense.1} parent=1 // pred_check_branch
      %28 = sbr.rel (0) target = $region13
    $region12: #{decoder_dense.1} parent=1 // pred_region
      _
    $region13: #{decoder_dense.1} parent=1 // pred_fallthru
      _
    // Predicated region
    $region14: #{decoder_dense.1} parent=1 // pred_check
      _
    $region15: #{decoder_dense.1} parent=1 // pred_check_branch
      %30 = sbr.rel (0) target = $region17
    $region16: #{decoder_dense.1} parent=1 // pred_region
      %32 = vsyncadd [#allocation5], 0
      %s33 = sshll.u32 %s3, 4
      %s34 = int_to_ptr.hbm [resolvable:$true] %s33
      %s35 = sshll.u32 [#allocation4], 4
      %s36 = int_to_ptr.vmem [resolvable:$true] %s35
      %41 = dma.hbm_to_vmem [thread:$0]  %s34, 28672, %s36, [#allocation5], 448, 448, 28
    $region17: #{decoder_dense.1} parent=1 // pred_fallthru
      _
    // Predicated region
    $region18: #{decoder_dense.1} parent=1 // pred_check
      _
    $region19: #{decoder_dense.1} parent=1 // pred_check_branch
      %43 = sbr.rel (0) target = $region21
    $region20: #{decoder_dense.1} parent=1 // pred_region
      _
    $region21: #{decoder_dense.1} parent=1 // pred_fallthru
      _
    // Predicated region
    $region22: #{decoder_dense.1} parent=1 // pred_check
      _
    $region23: #{decoder_dense.1} parent=1 // pred_check_branch
      %45 = sbr.rel (0) target = $region25
    $region24: #{decoder_dense.1} parent=1 // pred_region
      %47 = dma.done [#allocation3], 4096
    $region25: #{decoder_dense.1} parent=1 // pred_fallthru
      _
    // Predicated region
    $region26: #{decoder_dense.1} parent=1 // pred_check
      _
    $region27: #{decoder_dense.1} parent=1 // pred_check_branch
      %49 = sbr.rel (0) target = $region29
    $region28: #{decoder_dense.1} parent=1 // pred_region
      %51 = dma.done [#allocation5], 28672
    $region29: #{decoder_dense.1} parent=1 // pred_fallthru
      _
    %v52 = vld [vmem:[%s0] sm:$0xf]
    %v53 = vld [vmem:[#allocation2] sm:$0xff]
    %v54 = vld [vmem:[#allocation2 + $0x8] sm:$0xff]
    %v55 = vld [vmem:[#allocation2 + $0x10] sm:$0xff]
    %v56 = vld [vmem:[#allocation2 + $0x18] sm:$0xff]
    %v57 = vld [vmem:[#allocation2 + $0x20] sm:$0xff]
    %v58 = vld [vmem:[#allocation2 + $0x28] sm:$0xff]
    %v59 = vld [vmem:[#allocation2 + $0x30] sm:$0xff]
    %v60 = vld [vmem:[#allocation2 + $0x38] sm:$0xff]
    %v61 = vld [vmem:[#allocation2 + $0x40] sm:$0xff]
    %v62 = vld [vmem:[#allocation2 + $0x48] sm:$0xff]
    %v63 = vld [vmem:[#allocation2 + $0x50] sm:$0xff]
    %v64 = vld [vmem:[#allocation2 + $0x58] sm:$0xff]
    %v65 = vld [vmem:[#allocation2 + $0x60] sm:$0xff]
    %v66 = vld [vmem:[#allocation2 + $0x68] sm:$0xff]
    %v67 = vld [vmem:[#allocation2 + $0x70] sm:$0xff]
    %v68 = vld [vmem:[#allocation2 + $0x78] sm:$0xff]
    %v69 = vld [vmem:[#allocation2 + $0x80] sm:$0xff]
    %v70 = vld [vmem:[#allocation2 + $0x88] sm:$0xff]
    %v71 = vld [vmem:[#allocation2 + $0x90] sm:$0xff]
    %v72 = vld [vmem:[#allocation2 + $0x98] sm:$0xff]
    %v73 = vld [vmem:[#allocation2 + $0xa0] sm:$0xff]
    %v74 = vld [vmem:[#allocation2 + $0xa8] sm:$0xff]
    %v75 = vld [vmem:[#allocation2 + $0xb0] sm:$0xff]
    %v76 = vld [vmem:[#allocation2 + $0xb8] sm:$0xff]
    %v77 = vld [vmem:[#allocation2 + $0xc0] sm:$0xff]
    %v78 = vld [vmem:[#allocation2 + $0xc8] sm:$0xff]
    %v79 = vld [vmem:[#allocation2 + $0xd0] sm:$0xff]
    %v80 = vld [vmem:[#allocation2 + $0xd8] sm:$0xff]
    %v81 = vld [vmem:[#allocation2 + $0xe0] sm:$0xff]
    %v82 = vld [vmem:[#allocation2 + $0xe8] sm:$0xff]
    %v83 = vld [vmem:[#allocation2 + $0xf0] sm:$0xff]
    %v84 = vld [vmem:[#allocation2 + $0xf8] sm:$0xff]
    %v85 = vld [vmem:[%s2] sm:$0xf]
    %v87 = vperm.slane %v85, 0
    %v88 = vperm.slane %v85, 1
    %v89 = vperm.slane %v85, 2
    %v90 = vperm.slane %v85, 3
    %v127 = vunpack.c.l.b16 %v53
    %v128 = vunpack.c.h.b16 %v53
    %v129 = vunpack.c.l.b16 %v54
    %v130 = vunpack.c.h.b16 %v54
    %v131 = vunpack.c.l.b16 %v55
    %v132 = vunpack.c.h.b16 %v55
    %v133 = vunpack.c.l.b16 %v56
    %v134 = vunpack.c.h.b16 %v56
    %v135 = vunpack.c.l.b16 %v57
    %v136 = vunpack.c.h.b16 %v57
    %v137 = vunpack.c.l.b16 %v58
    %v138 = vunpack.c.h.b16 %v58
    %v139 = vunpack.c.l.b16 %v59
    %v140 = vunpack.c.h.b16 %v59
    %v141 = vunpack.c.l.b16 %v60
    %v142 = vunpack.c.h.b16 %v60
    %v143 = vunpack.c.l.b16 %v61
    %v144 = vunpack.c.h.b16 %v61
    %v145 = vunpack.c.l.b16 %v62
    %v146 = vunpack.c.h.b16 %v62
    %v147 = vunpack.c.l.b16 %v63
    %v148 = vunpack.c.h.b16 %v63
    %v149 = vunpack.c.l.b16 %v64
    %v150 = vunpack.c.h.b16 %v64
    %v151 = vunpack.c.l.b16 %v65
    %v152 = vunpack.c.h.b16 %v65
    %v153 = vunpack.c.l.b16 %v66
    %v154 = vunpack.c.h.b16 %v66
    %v155 = vunpack.c.l.b16 %v67
    %v156 = vunpack.c.h.b16 %v67
    %v157 = vunpack.c.l.b16 %v68
    %v158 = vunpack.c.h.b16 %v68
    %v159 = vunpack.c.l.b16 %v69
    %v160 = vunpack.c.h.b16 %v69
    %v161 = vunpack.c.l.b16 %v70
    %v162 = vunpack.c.h.b16 %v70
    %v163 = vunpack.c.l.b16 %v71
    %v164 = vunpack.c.h.b16 %v71
    %v165 = vunpack.c.l.b16 %v72
    %v166 = vunpack.c.h.b16 %v72
    %v167 = vunpack.c.l.b16 %v73
    %v168 = vunpack.c.h.b16 %v73
    %v169 = vunpack.c.l.b16 %v74
    %v170 = vunpack.c.h.b16 %v74
    %v171 = vunpack.c.l.b16 %v75
    %v172 = vunpack.c.h.b16 %v75
    %v173 = vunpack.c.l.b16 %v76
    %v174 = vunpack.c.h.b16 %v76
    %v175 = vunpack.c.l.b16 %v77
    %v176 = vunpack.c.h.b16 %v77
    %v177 = vunpack.c.l.b16 %v78
    %v178 = vunpack.c.h.b16 %v78
    %v179 = vunpack.c.l.b16 %v79
    %v180 = vunpack.c.h.b16 %v79
    %v181 = vunpack.c.l.b16 %v80
    %v182 = vunpack.c.h.b16 %v80
    %v183 = vunpack.c.l.b16 %v81
    %v184 = vunpack.c.h.b16 %v81
    %v185 = vunpack.c.l.b16 %v82
    %v186 = vunpack.c.h.b16 %v82
    %v187 = vunpack.c.l.b16 %v83
    %v188 = vunpack.c.h.b16 %v83
    %v189 = vunpack.c.l.b16 %v84
    %v190 = vunpack.c.h.b16 %v84
    %v191 = vpack.c.b16 %v131, %v127
    %v192 = vpack.c.b16 %v132, %v128
    %v193 = vpack.c.b16 %v133, %v129
    %v194 = vpack.c.b16 %v134, %v130
    %v195 = vpack.c.b16 %v139, %v135
    %v196 = vpack.c.b16 %v140, %v136
    %v197 = vpack.c.b16 %v141, %v137
    %v198 = vpack.c.b16 %v142, %v138
    %v199 = vpack.c.b16 %v147, %v143
    %v200 = vpack.c.b16 %v148, %v144
    %v201 = vpack.c.b16 %v149, %v145
    %v202 = vpack.c.b16 %v150, %v146
    %v203 = vpack.c.b16 %v155, %v151
    %v204 = vpack.c.b16 %v156, %v152
    %v205 = vpack.c.b16 %v157, %v153
    %v206 = vpack.c.b16 %v158, %v154
    %v207 = vpack.c.b16 %v163, %v159
    %v208 = vpack.c.b16 %v164, %v160
    %v209 = vpack.c.b16 %v165, %v161
    %v210 = vpack.c.b16 %v166, %v162
    %v211 = vpack.c.b16 %v171, %v167
    %v212 = vpack.c.b16 %v172, %v168
    %v213 = vpack.c.b16 %v173, %v169
    %v214 = vpack.c.b16 %v174, %v170
    %v215 = vpack.c.b16 %v179, %v175
    %v216 = vpack.c.b16 %v180, %v176
    %v217 = vpack.c.b16 %v181, %v177
    %v218 = vpack.c.b16 %v182, %v178
    %v219 = vpack.c.b16 %v187, %v183
    %v220 = vpack.c.b16 %v188, %v184
    %v221 = vpack.c.b16 %v189, %v185
    %v222 = vpack.c.b16 %v190, %v186
    %255 = vmatpush.bf16.msra.mxu0 %v219
    %256 = vmatpush.bf16.msra.mxu0 %v215
    %257 = vmatpush.bf16.msra.mxu0 %v211
    %258 = vmatpush.bf16.msra.mxu0 %v207
    %259 = vmatpush.bf16.msra.mxu0 %v203
    %260 = vmatpush.bf16.msra.mxu0 %v199
    %261 = vmatpush.bf16.msra.mxu0 %v195
    %262 = vmatpush.bf16.msra.mxu0 %v191
    %263 = vmatmul.bf16.gmra.mxu0 %v52
    %v264 = vpop.f32.mrf.mxu0
    %v265 = vadd.f32 %v87, %v264
    %v266 = vpop.f32.mrf.mxu0
    %267 = vdwg.mxu0
    %268 = vmatpush.bf16.msra.mxu0 %v220
    %269 = vmatpush.bf16.msra.mxu0 %v216
    %270 = vmatpush.bf16.msra.mxu0 %v212
    %271 = vmatpush.bf16.msra.mxu0 %v208
    %272 = vmatpush.bf16.msra.mxu0 %v204
    %273 = vmatpush.bf16.msra.mxu0 %v200
    %274 = vmatpush.bf16.msra.mxu0 %v196
    %275 = vmatpush.bf16.msra.mxu0 %v192
    %276 = vmatmul.bf16.gmra.mxu0 %v52
    %v277 = vpop.f32.mrf.mxu0
    %v278 = vadd.f32 %v88, %v277
    %v279 = vpop.f32.mrf.mxu0
    %280 = vdwg.mxu0
    %281 = vmatpush.bf16.msra.mxu0 %v221
    %282 = vmatpush.bf16.msra.mxu0 %v217
    %283 = vmatpush.bf16.msra.mxu0 %v213
    %284 = vmatpush.bf16.msra.mxu0 %v209
    %285 = vmatpush.bf16.msra.mxu0 %v205
    %286 = vmatpush.bf16.msra.mxu0 %v201
    %287 = vmatpush.bf16.msra.mxu0 %v197
    %288 = vmatpush.bf16.msra.mxu0 %v193
    %289 = vmatmul.bf16.gmra.mxu0 %v52
    %v290 = vpop.f32.mrf.mxu0
    %v291 = vadd.f32 %v89, %v290
    %v292 = vpop.f32.mrf.mxu0
    %293 = vdwg.mxu0
    %294 = vmatpush.bf16.msra.mxu0 %v222
    %295 = vmatpush.bf16.msra.mxu0 %v218
    %296 = vmatpush.bf16.msra.mxu0 %v214
    %297 = vmatpush.bf16.msra.mxu0 %v210
    %298 = vmatpush.bf16.msra.mxu0 %v206
    %299 = vmatpush.bf16.msra.mxu0 %v202
    %300 = vmatpush.bf16.msra.mxu0 %v198
    %301 = vmatpush.bf16.msra.mxu0 %v194
    %302 = vmatmul.bf16.gmra.mxu0 %v52
    %v303 = vpop.f32.mrf.mxu0
    %v304 = vadd.f32 %v90, %v303
    %v305 = vpop.f32.mrf.mxu0
    %306 = vdwg.mxu0
    %v307 = vmax.f32 %v265, 0.0
    %v308 = vmax.f32 %v278, 0.0
    %v309 = vmax.f32 %v291, 0.0
    %v310 = vmax.f32 %v304, 0.0
    %v311 = vpack.c.bf16 %v307, %v307
    %v312 = vpack.c.bf16 %v308, %v308
    %v313 = vpack.c.bf16 %v309, %v309
    %v314 = vpack.c.bf16 %v310, %v310
    %v315 = vld [vmem:[#allocation4] sm:$0xff]
    %v316 = vld [vmem:[#allocation4 + $0x8] sm:$0xff]
    %v317 = vld [vmem:[#allocation4 + $0x10] sm:$0xff]
    %v318 = vld [vmem:[#allocation4 + $0x18] sm:$0xf]
    %v319 = vld [vmem:[#allocation4 + $0x1c] sm:$0xff]
    %v320 = vld [vmem:[#allocation4 + $0x24] sm:$0xff]
    %v321 = vld [vmem:[#allocation4 + $0x2c] sm:$0xff]
    %v322 = vld [vmem:[#allocation4 + $0x34] sm:$0xf]
    %v323 = vld [vmem:[#allocation4 + $0x38] sm:$0xff]
    %v324 = vld [vmem:[#allocation4 + $0x40] sm:$0xff]
    %v325 = vld [vmem:[#allocation4 + $0x48] sm:$0xff]
    %v326 = vld [vmem:[#allocation4 + $0x50] sm:$0xf]
    %v327 = vld [vmem:[#allocation4 + $0x54] sm:$0xff]
    %v328 = vld [vmem:[#allocation4 + $0x5c] sm:$0xff]
    %v329 = vld [vmem:[#allocation4 + $0x64] sm:$0xff]
    %v330 = vld [vmem:[#allocation4 + $0x6c] sm:$0xf]
    %v331 = vld [vmem:[#allocation4 + $0x70] sm:$0xff]
    %v332 = vld [vmem:[#allocation4 + $0x78] sm:$0xff]
    %v333 = vld [vmem:[#allocation4 + $0x80] sm:$0xff]
    %v334 = vld [vmem:[#allocation4 + $0x88] sm:$0xf]
    %v335 = vld [vmem:[#allocation4 + $0x8c] sm:$0xff]
    %v336 = vld [vmem:[#allocation4 + $0x94] sm:$0xff]
    %v337 = vld [vmem:[#allocation4 + $0x9c] sm:$0xff]
    %v338 = vld [vmem:[#allocation4 + $0xa4] sm:$0xf]
    %v339 = vld [vmem:[#allocation4 + $0xa8] sm:$0xff]
    %v340 = vld [vmem:[#allocation4 + $0xb0] sm:$0xff]
    %v341 = vld [vmem:[#allocation4 + $0xb8] sm:$0xff]
    %v342 = vld [vmem:[#allocation4 + $0xc0] sm:$0xf]
    %v343 = vld [vmem:[#allocation4 + $0xc4] sm:$0xff]
    %v344 = vld [vmem:[#allocation4 + $0xcc] sm:$0xff]
    %v345 = vld [vmem:[#allocation4 + $0xd4] sm:$0xff]
    %v346 = vld [vmem:[#allocation4 + $0xdc] sm:$0xf]
    %v347 = vld [vmem:[#allocation4 + $0xe0] sm:$0xff]
    %v348 = vld [vmem:[#allocation4 + $0xe8] sm:$0xff]
    %v349 = vld [vmem:[#allocation4 + $0xf0] sm:$0xff]
    %v350 = vld [vmem:[#allocation4 + $0xf8] sm:$0xf]
    %v351 = vld [vmem:[#allocation4 + $0xfc] sm:$0xff]
    %v352 = vld [vmem:[#allocation4 + $0x104] sm:$0xff]
    %v353 = vld [vmem:[#allocation4 + $0x10c] sm:$0xff]
    %v354 = vld [vmem:[#allocation4 + $0x114] sm:$0xf]
    %v355 = vld [vmem:[#allocation4 + $0x118] sm:$0xff]
    %v356 = vld [vmem:[#allocation4 + $0x120] sm:$0xff]
    %v357 = vld [vmem:[#allocation4 + $0x128] sm:$0xff]
    %v358 = vld [vmem:[#allocation4 + $0x130] sm:$0xf]
    %v359 = vld [vmem:[#allocation4 + $0x134] sm:$0xff]
    %v360 = vld [vmem:[#allocation4 + $0x13c] sm:$0xff]
    %v361 = vld [vmem:[#allocation4 + $0x144] sm:$0xff]
    %v362 = vld [vmem:[#allocation4 + $0x14c] sm:$0xf]
    %v363 = vld [vmem:[#allocation4 + $0x150] sm:$0xff]
    %v364 = vld [vmem:[#allocation4 + $0x158] sm:$0xff]
    %v365 = vld [vmem:[#allocation4 + $0x160] sm:$0xff]
    %v366 = vld [vmem:[#allocation4 + $0x168] sm:$0xf]
    %v367 = vld [vmem:[#allocation4 + $0x16c] sm:$0xff]
    %v368 = vld [vmem:[#allocation4 + $0x174] sm:$0xff]
    %v369 = vld [vmem:[#allocation4 + $0x17c] sm:$0xff]
    %v370 = vld [vmem:[#allocation4 + $0x184] sm:$0xf]
    %v371 = vld [vmem:[#allocation4 + $0x188] sm:$0xff]
    %v372 = vld [vmem:[#allocation4 + $0x190] sm:$0xff]
    %v373 = vld [vmem:[#allocation4 + $0x198] sm:$0xff]
    %v374 = vld [vmem:[#allocation4 + $0x1a0] sm:$0xf]
    %v375 = vld [vmem:[#allocation4 + $0x1a4] sm:$0xff]
    %v376 = vld [vmem:[#allocation4 + $0x1ac] sm:$0xff]
    %v377 = vld [vmem:[#allocation4 + $0x1b4] sm:$0xff]
    %v378 = vld [vmem:[#allocation4 + $0x1bc] sm:$0xf]
    %v379 = vld [vmem:[#allocation4 + $0x1c0] sm:$0xff]
    %v380 = vld [vmem:[#allocation4 + $0x1c8] sm:$0xff]
    %v381 = vld [vmem:[#allocation4 + $0x1d0] sm:$0xff]
    %v382 = vld [vmem:[#allocation4 + $0x1d8] sm:$0xf]
    %v383 = vld [vmem:[#allocation4 + $0x1dc] sm:$0xff]
    %v384 = vld [vmem:[#allocation4 + $0x1e4] sm:$0xff]
    %v385 = vld [vmem:[#allocation4 + $0x1ec] sm:$0xff]
    %v386 = vld [vmem:[#allocation4 + $0x1f4] sm:$0xf]
    %v387 = vld [vmem:[#allocation4 + $0x1f8] sm:$0xff]
    %v388 = vld [vmem:[#allocation4 + $0x200] sm:$0xff]
    %v389 = vld [vmem:[#allocation4 + $0x208] sm:$0xff]
    %v390 = vld [vmem:[#allocation4 + $0x210] sm:$0xf]
    %v391 = vld [vmem:[#allocation4 + $0x214] sm:$0xff]
    %v392 = vld [vmem:[#allocation4 + $0x21c] sm:$0xff]
    %v393 = vld [vmem:[#allocation4 + $0x224] sm:$0xff]
    %v394 = vld [vmem:[#allocation4 + $0x22c] sm:$0xf]
    %v395 = vld [vmem:[#allocation4 + $0x230] sm:$0xff]
    %v396 = vld [vmem:[#allocation4 + $0x238] sm:$0xff]
    %v397 = vld [vmem:[#allocation4 + $0x240] sm:$0xff]
    %v398 = vld [vmem:[#allocation4 + $0x248] sm:$0xf]
    %v399 = vld [vmem:[#allocation4 + $0x24c] sm:$0xff]
    %v400 = vld [vmem:[#allocation4 + $0x254] sm:$0xff]
    %v401 = vld [vmem:[#allocation4 + $0x25c] sm:$0xff]
    %v402 = vld [vmem:[#allocation4 + $0x264] sm:$0xf]
    %v403 = vld [vmem:[#allocation4 + $0x268] sm:$0xff]
    %v404 = vld [vmem:[#allocation4 + $0x270] sm:$0xff]
    %v405 = vld [vmem:[#allocation4 + $0x278] sm:$0xff]
    %v406 = vld [vmem:[#allocation4 + $0x280] sm:$0xf]
    %v407 = vld [vmem:[#allocation4 + $0x284] sm:$0xff]
    %v408 = vld [vmem:[#allocation4 + $0x28c] sm:$0xff]
    %v409 = vld [vmem:[#allocation4 + $0x294] sm:$0xff]
    %v410 = vld [vmem:[#allocation4 + $0x29c] sm:$0xf]
    %v411 = vld [vmem:[#allocation4 + $0x2a0] sm:$0xff]
    %v412 = vld [vmem:[#allocation4 + $0x2a8] sm:$0xff]
    %v413 = vld [vmem:[#allocation4 + $0x2b0] sm:$0xff]
    %v414 = vld [vmem:[#allocation4 + $0x2b8] sm:$0xf]
    %v415 = vld [vmem:[#allocation4 + $0x2bc] sm:$0xff]
    %v416 = vld [vmem:[#allocation4 + $0x2c4] sm:$0xff]
    %v417 = vld [vmem:[#allocation4 + $0x2cc] sm:$0xff]
    %v418 = vld [vmem:[#allocation4 + $0x2d4] sm:$0xf]
    %v419 = vld [vmem:[#allocation4 + $0x2d8] sm:$0xff]
    %v420 = vld [vmem:[#allocation4 + $0x2e0] sm:$0xff]
    %v421 = vld [vmem:[#allocation4 + $0x2e8] sm:$0xff]
    %v422 = vld [vmem:[#allocation4 + $0x2f0] sm:$0xf]
    %v423 = vld [vmem:[#allocation4 + $0x2f4] sm:$0xff]
    %v424 = vld [vmem:[#allocation4 + $0x2fc] sm:$0xff]
    %v425 = vld [vmem:[#allocation4 + $0x304] sm:$0xff]
    %v426 = vld [vmem:[#allocation4 + $0x30c] sm:$0xf]
    %v427 = vld [vmem:[#allocation4 + $0x310] sm:$0xff]
    %v428 = vld [vmem:[#allocation4 + $0x318] sm:$0xff]
    %v429 = vld [vmem:[#allocation4 + $0x320] sm:$0xff]
    %v430 = vld [vmem:[#allocation4 + $0x328] sm:$0xf]
    %v431 = vld [vmem:[#allocation4 + $0x32c] sm:$0xff]
    %v432 = vld [vmem:[#allocation4 + $0x334] sm:$0xff]
    %v433 = vld [vmem:[#allocation4 + $0x33c] sm:$0xff]
    %v434 = vld [vmem:[#allocation4 + $0x344] sm:$0xf]
    %v435 = vld [vmem:[#allocation4 + $0x348] sm:$0xff]
    %v436 = vld [vmem:[#allocation4 + $0x350] sm:$0xff]
    %v437 = vld [vmem:[#allocation4 + $0x358] sm:$0xff]
    %v438 = vld [vmem:[#allocation4 + $0x360] sm:$0xf]
    %v439 = vld [vmem:[#allocation4 + $0x364] sm:$0xff]
    %v440 = vld [vmem:[#allocation4 + $0x36c] sm:$0xff]
    %v441 = vld [vmem:[#allocation4 + $0x374] sm:$0xff]
    %v442 = vld [vmem:[#allocation4 + $0x37c] sm:$0xf]
    %v443 = vld [vmem:[#allocation4 + $0x380] sm:$0xff]
    %v444 = vld [vmem:[#allocation4 + $0x388] sm:$0xff]
    %v445 = vld [vmem:[#allocation4 + $0x390] sm:$0xff]
    %v446 = vld [vmem:[#allocation4 + $0x398] sm:$0xf]
    %v447 = vld [vmem:[#allocation4 + $0x39c] sm:$0xff]
    %v448 = vld [vmem:[#allocation4 + $0x3a4] sm:$0xff]
    %v449 = vld [vmem:[#allocation4 + $0x3ac] sm:$0xff]
    %v450 = vld [vmem:[#allocation4 + $0x3b4] sm:$0xf]
    %v451 = vld [vmem:[#allocation4 + $0x3b8] sm:$0xff]
    %v452 = vld [vmem:[#allocation4 + $0x3c0] sm:$0xff]
    %v453 = vld [vmem:[#allocation4 + $0x3c8] sm:$0xff]
    %v454 = vld [vmem:[#allocation4 + $0x3d0] sm:$0xf]
    %v455 = vld [vmem:[#allocation4 + $0x3d4] sm:$0xff]
    %v456 = vld [vmem:[#allocation4 + $0x3dc] sm:$0xff]
    %v457 = vld [vmem:[#allocation4 + $0x3e4] sm:$0xff]
    %v458 = vld [vmem:[#allocation4 + $0x3ec] sm:$0xf]
    %v459 = vld [vmem:[#allocation4 + $0x3f0] sm:$0xff]
    %v460 = vld [vmem:[#allocation4 + $0x3f8] sm:$0xff]
    %v461 = vld [vmem:[#allocation4 + $0x400] sm:$0xff]
    %v462 = vld [vmem:[#allocation4 + $0x408] sm:$0xf]
    %v463 = vld [vmem:[#allocation4 + $0x40c] sm:$0xff]
    %v464 = vld [vmem:[#allocation4 + $0x414] sm:$0xff]
    %v465 = vld [vmem:[#allocation4 + $0x41c] sm:$0xff]
    %v466 = vld [vmem:[#allocation4 + $0x424] sm:$0xf]
    %v467 = vld [vmem:[#allocation4 + $0x428] sm:$0xff]
    %v468 = vld [vmem:[#allocation4 + $0x430] sm:$0xff]
    %v469 = vld [vmem:[#allocation4 + $0x438] sm:$0xff]
    %v470 = vld [vmem:[#allocation4 + $0x440] sm:$0xf]
    %v471 = vld [vmem:[#allocation4 + $0x444] sm:$0xff]
    %v472 = vld [vmem:[#allocation4 + $0x44c] sm:$0xff]
    %v473 = vld [vmem:[#allocation4 + $0x454] sm:$0xff]
    %v474 = vld [vmem:[#allocation4 + $0x45c] sm:$0xf]
    %v475 = vld [vmem:[#allocation4 + $0x460] sm:$0xff]
    %v476 = vld [vmem:[#allocation4 + $0x468] sm:$0xff]
    %v477 = vld [vmem:[#allocation4 + $0x470] sm:$0xff]
    %v478 = vld [vmem:[#allocation4 + $0x478] sm:$0xf]
    %v479 = vld [vmem:[#allocation4 + $0x47c] sm:$0xff]
    %v480 = vld [vmem:[#allocation4 + $0x484] sm:$0xff]
    %v481 = vld [vmem:[#allocation4 + $0x48c] sm:$0xff]
    %v482 = vld [vmem:[#allocation4 + $0x494] sm:$0xf]
    %v483 = vld [vmem:[#allocation4 + $0x498] sm:$0xff]
    %v484 = vld [vmem:[#allocation4 + $0x4a0] sm:$0xff]
    %v485 = vld [vmem:[#allocation4 + $0x4a8] sm:$0xff]
    %v486 = vld [vmem:[#allocation4 + $0x4b0] sm:$0xf]
    %v487 = vld [vmem:[#allocation4 + $0x4b4] sm:$0xff]
    %v488 = vld [vmem:[#allocation4 + $0x4bc] sm:$0xff]
    %v489 = vld [vmem:[#allocation4 + $0x4c4] sm:$0xff]
    %v490 = vld [vmem:[#allocation4 + $0x4cc] sm:$0xf]
    %v491 = vld [vmem:[#allocation4 + $0x4d0] sm:$0xff]
    %v492 = vld [vmem:[#allocation4 + $0x4d8] sm:$0xff]
    %v493 = vld [vmem:[#allocation4 + $0x4e0] sm:$0xff]
    %v494 = vld [vmem:[#allocation4 + $0x4e8] sm:$0xf]
    %v495 = vld [vmem:[#allocation4 + $0x4ec] sm:$0xff]
    %v496 = vld [vmem:[#allocation4 + $0x4f4] sm:$0xff]
    %v497 = vld [vmem:[#allocation4 + $0x4fc] sm:$0xff]
    %v498 = vld [vmem:[#allocation4 + $0x504] sm:$0xf]
    %v499 = vld [vmem:[#allocation4 + $0x508] sm:$0xff]
    %v500 = vld [vmem:[#allocation4 + $0x510] sm:$0xff]
    %v501 = vld [vmem:[#allocation4 + $0x518] sm:$0xff]
    %v502 = vld [vmem:[#allocation4 + $0x520] sm:$0xf]
    %v503 = vld [vmem:[#allocation4 + $0x524] sm:$0xff]
    %v504 = vld [vmem:[#allocation4 + $0x52c] sm:$0xff]
    %v505 = vld [vmem:[#allocation4 + $0x534] sm:$0xff]
    %v506 = vld [vmem:[#allocation4 + $0x53c] sm:$0xf]
    %v507 = vld [vmem:[#allocation4 + $0x540] sm:$0xff]
    %v508 = vld [vmem:[#allocation4 + $0x548] sm:$0xff]
    %v509 = vld [vmem:[#allocation4 + $0x550] sm:$0xff]
    %v510 = vld [vmem:[#allocation4 + $0x558] sm:$0xf]
    %v511 = vld [vmem:[#allocation4 + $0x55c] sm:$0xff]
    %v512 = vld [vmem:[#allocation4 + $0x564] sm:$0xff]
    %v513 = vld [vmem:[#allocation4 + $0x56c] sm:$0xff]
    %v514 = vld [vmem:[#allocation4 + $0x574] sm:$0xf]
    %v515 = vld [vmem:[#allocation4 + $0x578] sm:$0xff]
    %v516 = vld [vmem:[#allocation4 + $0x580] sm:$0xff]
    %v517 = vld [vmem:[#allocation4 + $0x588] sm:$0xff]
    %v518 = vld [vmem:[#allocation4 + $0x590] sm:$0xf]
    %v519 = vld [vmem:[#allocation4 + $0x594] sm:$0xff]
    %v520 = vld [vmem:[#allocation4 + $0x59c] sm:$0xff]
    %v521 = vld [vmem:[#allocation4 + $0x5a4] sm:$0xff]
    %v522 = vld [vmem:[#allocation4 + $0x5ac] sm:$0xf]
    %v523 = vld [vmem:[#allocation4 + $0x5b0] sm:$0xff]
    %v524 = vld [vmem:[#allocation4 + $0x5b8] sm:$0xff]
    %v525 = vld [vmem:[#allocation4 + $0x5c0] sm:$0xff]
    %v526 = vld [vmem:[#allocation4 + $0x5c8] sm:$0xf]
    %v527 = vld [vmem:[#allocation4 + $0x5cc] sm:$0xff]
    %v528 = vld [vmem:[#allocation4 + $0x5d4] sm:$0xff]
    %v529 = vld [vmem:[#allocation4 + $0x5dc] sm:$0xff]
    %v530 = vld [vmem:[#allocation4 + $0x5e4] sm:$0xf]
    %v531 = vld [vmem:[#allocation4 + $0x5e8] sm:$0xff]
    %v532 = vld [vmem:[#allocation4 + $0x5f0] sm:$0xff]
    %v533 = vld [vmem:[#allocation4 + $0x5f8] sm:$0xff]
    %v534 = vld [vmem:[#allocation4 + $0x600] sm:$0xf]
    %v535 = vld [vmem:[#allocation4 + $0x604] sm:$0xff]
    %v536 = vld [vmem:[#allocation4 + $0x60c] sm:$0xff]
    %v537 = vld [vmem:[#allocation4 + $0x614] sm:$0xff]
    %v538 = vld [vmem:[#allocation4 + $0x61c] sm:$0xf]
    %v539 = vld [vmem:[#allocation4 + $0x620] sm:$0xff]
    %v540 = vld [vmem:[#allocation4 + $0x628] sm:$0xff]
    %v541 = vld [vmem:[#allocation4 + $0x630] sm:$0xff]
    %v542 = vld [vmem:[#allocation4 + $0x638] sm:$0xf]
    %v543 = vld [vmem:[#allocation4 + $0x63c] sm:$0xff]
    %v544 = vld [vmem:[#allocation4 + $0x644] sm:$0xff]
    %v545 = vld [vmem:[#allocation4 + $0x64c] sm:$0xff]
    %v546 = vld [vmem:[#allocation4 + $0x654] sm:$0xf]
    %v547 = vld [vmem:[#allocation4 + $0x658] sm:$0xff]
    %v548 = vld [vmem:[#allocation4 + $0x660] sm:$0xff]
    %v549 = vld [vmem:[#allocation4 + $0x668] sm:$0xff]
    %v550 = vld [vmem:[#allocation4 + $0x670] sm:$0xf]
    %v551 = vld [vmem:[#allocation4 + $0x674] sm:$0xff]
    %v552 = vld [vmem:[#allocation4 + $0x67c] sm:$0xff]
    %v553 = vld [vmem:[#allocation4 + $0x684] sm:$0xff]
    %v554 = vld [vmem:[#allocation4 + $0x68c] sm:$0xf]
    %v555 = vld [vmem:[#allocation4 + $0x690] sm:$0xff]
    %v556 = vld [vmem:[#allocation4 + $0x698] sm:$0xff]
    %v557 = vld [vmem:[#allocation4 + $0x6a0] sm:$0xff]
    %v558 = vld [vmem:[#allocation4 + $0x6a8] sm:$0xf]
    %v559 = vld [vmem:[#allocation4 + $0x6ac] sm:$0xff]
    %v560 = vld [vmem:[#allocation4 + $0x6b4] sm:$0xff]
    %v561 = vld [vmem:[#allocation4 + $0x6bc] sm:$0xff]
    %v562 = vld [vmem:[#allocation4 + $0x6c4] sm:$0xf]
    %v563 = vld [vmem:[#allocation4 + $0x6c8] sm:$0xff]
    %v564 = vld [vmem:[#allocation4 + $0x6d0] sm:$0xff]
    %v565 = vld [vmem:[#allocation4 + $0x6d8] sm:$0xff]
    %v566 = vld [vmem:[#allocation4 + $0x6e0] sm:$0xf]
    %v567 = vld [vmem:[#allocation4 + $0x6e4] sm:$0xff]
    %v568 = vld [vmem:[#allocation4 + $0x6ec] sm:$0xff]
    %v569 = vld [vmem:[#allocation4 + $0x6f4] sm:$0xff]
    %v570 = vld [vmem:[#allocation4 + $0x6fc] sm:$0xf]
    %v571 = vld [vmem:[%s4] sm:$0xff]
    %v573 = vperm.slane %v571, 0
    %v574 = vperm.slane %v571, 1
    %v575 = vperm.slane %v571, 2
    %v576 = vperm.slane %v571, 3
    %v577 = vperm.slane %v571, 4
    %v578 = vperm.slane %v571, 5
    %v579 = vperm.slane %v571, 6
    %v843 = vunpack.c.l.b16 %v315
    %v844 = vunpack.c.h.b16 %v315
    %v845 = vunpack.c.l.b16 %v316
    %v846 = vunpack.c.h.b16 %v316
    %v847 = vunpack.c.l.b16 %v317
    %v848 = vunpack.c.h.b16 %v317
    %v849 = vunpack.c.l.b16 %v318
    %v850 = vunpack.c.l.b16 %v319
    %v851 = vunpack.c.h.b16 %v319
    %v852 = vunpack.c.l.b16 %v320
    %v853 = vunpack.c.h.b16 %v320
    %v854 = vunpack.c.l.b16 %v321
    %v855 = vunpack.c.h.b16 %v321
    %v856 = vunpack.c.l.b16 %v322
    %v857 = vunpack.c.l.b16 %v323
    %v858 = vunpack.c.h.b16 %v323
    %v859 = vunpack.c.l.b16 %v324
    %v860 = vunpack.c.h.b16 %v324
    %v861 = vunpack.c.l.b16 %v325
    %v862 = vunpack.c.h.b16 %v325
    %v863 = vunpack.c.l.b16 %v326
    %v864 = vunpack.c.l.b16 %v327
    %v865 = vunpack.c.h.b16 %v327
    %v866 = vunpack.c.l.b16 %v328
    %v867 = vunpack.c.h.b16 %v328
    %v868 = vunpack.c.l.b16 %v329
    %v869 = vunpack.c.h.b16 %v329
    %v870 = vunpack.c.l.b16 %v330
    %v871 = vunpack.c.l.b16 %v331
    %v872 = vunpack.c.h.b16 %v331
    %v873 = vunpack.c.l.b16 %v332
    %v874 = vunpack.c.h.b16 %v332
    %v875 = vunpack.c.l.b16 %v333
    %v876 = vunpack.c.h.b16 %v333
    %v877 = vunpack.c.l.b16 %v334
    %v878 = vunpack.c.l.b16 %v335
    %v879 = vunpack.c.h.b16 %v335
    %v880 = vunpack.c.l.b16 %v336
    %v881 = vunpack.c.h.b16 %v336
    %v882 = vunpack.c.l.b16 %v337
    %v883 = vunpack.c.h.b16 %v337
    %v884 = vunpack.c.l.b16 %v338
    %v885 = vunpack.c.l.b16 %v339
    %v886 = vunpack.c.h.b16 %v339
    %v887 = vunpack.c.l.b16 %v340
    %v888 = vunpack.c.h.b16 %v340
    %v889 = vunpack.c.l.b16 %v341
    %v890 = vunpack.c.h.b16 %v341
    %v891 = vunpack.c.l.b16 %v342
    %v892 = vunpack.c.l.b16 %v343
    %v893 = vunpack.c.h.b16 %v343
    %v894 = vunpack.c.l.b16 %v344
    %v895 = vunpack.c.h.b16 %v344
    %v896 = vunpack.c.l.b16 %v345
    %v897 = vunpack.c.h.b16 %v345
    %v898 = vunpack.c.l.b16 %v346
    %v899 = vunpack.c.l.b16 %v347
    %v900 = vunpack.c.h.b16 %v347
    %v901 = vunpack.c.l.b16 %v348
    %v902 = vunpack.c.h.b16 %v348
    %v903 = vunpack.c.l.b16 %v349
    %v904 = vunpack.c.h.b16 %v349
    %v905 = vunpack.c.l.b16 %v350
    %v906 = vunpack.c.l.b16 %v351
    %v907 = vunpack.c.h.b16 %v351
    %v908 = vunpack.c.l.b16 %v352
    %v909 = vunpack.c.h.b16 %v352
    %v910 = vunpack.c.l.b16 %v353
    %v911 = vunpack.c.h.b16 %v353
    %v912 = vunpack.c.l.b16 %v354
    %v913 = vunpack.c.l.b16 %v355
    %v914 = vunpack.c.h.b16 %v355
    %v915 = vunpack.c.l.b16 %v356
    %v916 = vunpack.c.h.b16 %v356
    %v917 = vunpack.c.l.b16 %v357
    %v918 = vunpack.c.h.b16 %v357
    %v919 = vunpack.c.l.b16 %v358
    %v920 = vunpack.c.l.b16 %v359
    %v921 = vunpack.c.h.b16 %v359
    %v922 = vunpack.c.l.b16 %v360
    %v923 = vunpack.c.h.b16 %v360
    %v924 = vunpack.c.l.b16 %v361
    %v925 = vunpack.c.h.b16 %v361
    %v926 = vunpack.c.l.b16 %v362
    %v927 = vunpack.c.l.b16 %v363
    %v928 = vunpack.c.h.b16 %v363
    %v929 = vunpack.c.l.b16 %v364
    %v930 = vunpack.c.h.b16 %v364
    %v931 = vunpack.c.l.b16 %v365
    %v932 = vunpack.c.h.b16 %v365
    %v933 = vunpack.c.l.b16 %v366
    %v934 = vunpack.c.l.b16 %v367
    %v935 = vunpack.c.h.b16 %v367
    %v936 = vunpack.c.l.b16 %v368
    %v937 = vunpack.c.h.b16 %v368
    %v938 = vunpack.c.l.b16 %v369
    %v939 = vunpack.c.h.b16 %v369
    %v940 = vunpack.c.l.b16 %v370
    %v941 = vunpack.c.l.b16 %v371
    %v942 = vunpack.c.h.b16 %v371
    %v943 = vunpack.c.l.b16 %v372
    %v944 = vunpack.c.h.b16 %v372
    %v945 = vunpack.c.l.b16 %v373
    %v946 = vunpack.c.h.b16 %v373
    %v947 = vunpack.c.l.b16 %v374
    %v948 = vunpack.c.l.b16 %v375
    %v949 = vunpack.c.h.b16 %v375
    %v950 = vunpack.c.l.b16 %v376
    %v951 = vunpack.c.h.b16 %v376
    %v952 = vunpack.c.l.b16 %v377
    %v953 = vunpack.c.h.b16 %v377
    %v954 = vunpack.c.l.b16 %v378
    %v955 = vunpack.c.l.b16 %v379
    %v956 = vunpack.c.h.b16 %v379
    %v957 = vunpack.c.l.b16 %v380
    %v958 = vunpack.c.h.b16 %v380
    %v959 = vunpack.c.l.b16 %v381
    %v960 = vunpack.c.h.b16 %v381
    %v961 = vunpack.c.l.b16 %v382
    %v962 = vunpack.c.l.b16 %v383
    %v963 = vunpack.c.h.b16 %v383
    %v964 = vunpack.c.l.b16 %v384
    %v965 = vunpack.c.h.b16 %v384
    %v966 = vunpack.c.l.b16 %v385
    %v967 = vunpack.c.h.b16 %v385
    %v968 = vunpack.c.l.b16 %v386
    %v969 = vunpack.c.l.b16 %v387
    %v970 = vunpack.c.h.b16 %v387
    %v971 = vunpack.c.l.b16 %v388
    %v972 = vunpack.c.h.b16 %v388
    %v973 = vunpack.c.l.b16 %v389
    %v974 = vunpack.c.h.b16 %v389
    %v975 = vunpack.c.l.b16 %v390
    %v976 = vunpack.c.l.b16 %v391
    %v977 = vunpack.c.h.b16 %v391
    %v978 = vunpack.c.l.b16 %v392
    %v979 = vunpack.c.h.b16 %v392
    %v980 = vunpack.c.l.b16 %v393
    %v981 = vunpack.c.h.b16 %v393
    %v982 = vunpack.c.l.b16 %v394
    %v983 = vunpack.c.l.b16 %v395
    %v984 = vunpack.c.h.b16 %v395
    %v985 = vunpack.c.l.b16 %v396
    %v986 = vunpack.c.h.b16 %v396
    %v987 = vunpack.c.l.b16 %v397
    %v988 = vunpack.c.h.b16 %v397
    %v989 = vunpack.c.l.b16 %v398
    %v990 = vunpack.c.l.b16 %v399
    %v991 = vunpack.c.h.b16 %v399
    %v992 = vunpack.c.l.b16 %v400
    %v993 = vunpack.c.h.b16 %v400
    %v994 = vunpack.c.l.b16 %v401
    %v995 = vunpack.c.h.b16 %v401
    %v996 = vunpack.c.l.b16 %v402
    %v997 = vunpack.c.l.b16 %v403
    %v998 = vunpack.c.h.b16 %v403
    %v999 = vunpack.c.l.b16 %v404
    %v1000 = vunpack.c.h.b16 %v404
    %v1001 = vunpack.c.l.b16 %v405
    %v1002 = vunpack.c.h.b16 %v405
    %v1003 = vunpack.c.l.b16 %v406
    %v1004 = vunpack.c.l.b16 %v407
    %v1005 = vunpack.c.h.b16 %v407
    %v1006 = vunpack.c.l.b16 %v408
    %v1007 = vunpack.c.h.b16 %v408
    %v1008 = vunpack.c.l.b16 %v409
    %v1009 = vunpack.c.h.b16 %v409
    %v1010 = vunpack.c.l.b16 %v410
    %v1011 = vunpack.c.l.b16 %v411
    %v1012 = vunpack.c.h.b16 %v411
    %v1013 = vunpack.c.l.b16 %v412
    %v1014 = vunpack.c.h.b16 %v412
    %v1015 = vunpack.c.l.b16 %v413
    %v1016 = vunpack.c.h.b16 %v413
    %v1017 = vunpack.c.l.b16 %v414
    %v1018 = vunpack.c.l.b16 %v415
    %v1019 = vunpack.c.h.b16 %v415
    %v1020 = vunpack.c.l.b16 %v416
    %v1021 = vunpack.c.h.b16 %v416
    %v1022 = vunpack.c.l.b16 %v417
    %v1023 = vunpack.c.h.b16 %v417
    %v1024 = vunpack.c.l.b16 %v418
    %v1025 = vunpack.c.l.b16 %v419
    %v1026 = vunpack.c.h.b16 %v419
    %v1027 = vunpack.c.l.b16 %v420
    %v1028 = vunpack.c.h.b16 %v420
    %v1029 = vunpack.c.l.b16 %v421
    %v1030 = vunpack.c.h.b16 %v421
    %v1031 = vunpack.c.l.b16 %v422
    %v1032 = vunpack.c.l.b16 %v423
    %v1033 = vunpack.c.h.b16 %v423
    %v1034 = vunpack.c.l.b16 %v424
    %v1035 = vunpack.c.h.b16 %v424
    %v1036 = vunpack.c.l.b16 %v425
    %v1037 = vunpack.c.h.b16 %v425
    %v1038 = vunpack.c.l.b16 %v426
    %v1039 = vunpack.c.l.b16 %v427
    %v1040 = vunpack.c.h.b16 %v427
    %v1041 = vunpack.c.l.b16 %v428
    %v1042 = vunpack.c.h.b16 %v428
    %v1043 = vunpack.c.l.b16 %v429
    %v1044 = vunpack.c.h.b16 %v429
    %v1045 = vunpack.c.l.b16 %v430
    %v1046 = vunpack.c.l.b16 %v431
    %v1047 = vunpack.c.h.b16 %v431
    %v1048 = vunpack.c.l.b16 %v432
    %v1049 = vunpack.c.h.b16 %v432
    %v1050 = vunpack.c.l.b16 %v433
    %v1051 = vunpack.c.h.b16 %v433
    %v1052 = vunpack.c.l.b16 %v434
    %v1053 = vunpack.c.l.b16 %v435
    %v1054 = vunpack.c.h.b16 %v435
    %v1055 = vunpack.c.l.b16 %v436
    %v1056 = vunpack.c.h.b16 %v436
    %v1057 = vunpack.c.l.b16 %v437
    %v1058 = vunpack.c.h.b16 %v437
    %v1059 = vunpack.c.l.b16 %v438
    %v1060 = vunpack.c.l.b16 %v439
    %v1061 = vunpack.c.h.b16 %v439
    %v1062 = vunpack.c.l.b16 %v440
    %v1063 = vunpack.c.h.b16 %v440
    %v1064 = vunpack.c.l.b16 %v441
    %v1065 = vunpack.c.h.b16 %v441
    %v1066 = vunpack.c.l.b16 %v442
    %v1067 = vunpack.c.l.b16 %v443
    %v1068 = vunpack.c.h.b16 %v443
    %v1069 = vunpack.c.l.b16 %v444
    %v1070 = vunpack.c.h.b16 %v444
    %v1071 = vunpack.c.l.b16 %v445
    %v1072 = vunpack.c.h.b16 %v445
    %v1073 = vunpack.c.l.b16 %v446
    %v1074 = vunpack.c.l.b16 %v447
    %v1075 = vunpack.c.h.b16 %v447
    %v1076 = vunpack.c.l.b16 %v448
    %v1077 = vunpack.c.h.b16 %v448
    %v1078 = vunpack.c.l.b16 %v449
    %v1079 = vunpack.c.h.b16 %v449
    %v1080 = vunpack.c.l.b16 %v450
    %v1081 = vunpack.c.l.b16 %v451
    %v1082 = vunpack.c.h.b16 %v451
    %v1083 = vunpack.c.l.b16 %v452
    %v1084 = vunpack.c.h.b16 %v452
    %v1085 = vunpack.c.l.b16 %v453
    %v1086 = vunpack.c.h.b16 %v453
    %v1087 = vunpack.c.l.b16 %v454
    %v1088 = vunpack.c.l.b16 %v455
    %v1089 = vunpack.c.h.b16 %v455
    %v1090 = vunpack.c.l.b16 %v456
    %v1091 = vunpack.c.h.b16 %v456
    %v1092 = vunpack.c.l.b16 %v457
    %v1093 = vunpack.c.h.b16 %v457
    %v1094 = vunpack.c.l.b16 %v458
    %v1095 = vunpack.c.l.b16 %v459
    %v1096 = vunpack.c.h.b16 %v459
    %v1097 = vunpack.c.l.b16 %v460
    %v1098 = vunpack.c.h.b16 %v460
    %v1099 = vunpack.c.l.b16 %v461
    %v1100 = vunpack.c.h.b16 %v461
    %v1101 = vunpack.c.l.b16 %v462
    %v1102 = vunpack.c.l.b16 %v463
    %v1103 = vunpack.c.h.b16 %v463
    %v1104 = vunpack.c.l.b16 %v464
    %v1105 = vunpack.c.h.b16 %v464
    %v1106 = vunpack.c.l.b16 %v465
    %v1107 = vunpack.c.h.b16 %v465
    %v1108 = vunpack.c.l.b16 %v466
    %v1109 = vunpack.c.l.b16 %v467
    %v1110 = vunpack.c.h.b16 %v467
    %v1111 = vunpack.c.l.b16 %v468
    %v1112 = vunpack.c.h.b16 %v468
    %v1113 = vunpack.c.l.b16 %v469
    %v1114 = vunpack.c.h.b16 %v469
    %v1115 = vunpack.c.l.b16 %v470
    %v1116 = vunpack.c.l.b16 %v471
    %v1117 = vunpack.c.h.b16 %v471
    %v1118 = vunpack.c.l.b16 %v472
    %v1119 = vunpack.c.h.b16 %v472
    %v1120 = vunpack.c.l.b16 %v473
    %v1121 = vunpack.c.h.b16 %v473
    %v1122 = vunpack.c.l.b16 %v474
    %v1123 = vunpack.c.l.b16 %v475
    %v1124 = vunpack.c.h.b16 %v475
    %v1125 = vunpack.c.l.b16 %v476
    %v1126 = vunpack.c.h.b16 %v476
    %v1127 = vunpack.c.l.b16 %v477
    %v1128 = vunpack.c.h.b16 %v477
    %v1129 = vunpack.c.l.b16 %v478
    %v1130 = vunpack.c.l.b16 %v479
    %v1131 = vunpack.c.h.b16 %v479
    %v1132 = vunpack.c.l.b16 %v480
    %v1133 = vunpack.c.h.b16 %v480
    %v1134 = vunpack.c.l.b16 %v481
    %v1135 = vunpack.c.h.b16 %v481
    %v1136 = vunpack.c.l.b16 %v482
    %v1137 = vunpack.c.l.b16 %v483
    %v1138 = vunpack.c.h.b16 %v483
    %v1139 = vunpack.c.l.b16 %v484
    %v1140 = vunpack.c.h.b16 %v484
    %v1141 = vunpack.c.l.b16 %v485
    %v1142 = vunpack.c.h.b16 %v485
    %v1143 = vunpack.c.l.b16 %v486
    %v1144 = vunpack.c.l.b16 %v487
    %v1145 = vunpack.c.h.b16 %v487
    %v1146 = vunpack.c.l.b16 %v488
    %v1147 = vunpack.c.h.b16 %v488
    %v1148 = vunpack.c.l.b16 %v489
    %v1149 = vunpack.c.h.b16 %v489
    %v1150 = vunpack.c.l.b16 %v490
    %v1151 = vunpack.c.l.b16 %v491
    %v1152 = vunpack.c.h.b16 %v491
    %v1153 = vunpack.c.l.b16 %v492
    %v1154 = vunpack.c.h.b16 %v492
    %v1155 = vunpack.c.l.b16 %v493
    %v1156 = vunpack.c.h.b16 %v493
    %v1157 = vunpack.c.l.b16 %v494
    %v1158 = vunpack.c.l.b16 %v495
    %v1159 = vunpack.c.h.b16 %v495
    %v1160 = vunpack.c.l.b16 %v496
    %v1161 = vunpack.c.h.b16 %v496
    %v1162 = vunpack.c.l.b16 %v497
    %v1163 = vunpack.c.h.b16 %v497
    %v1164 = vunpack.c.l.b16 %v498
    %v1165 = vunpack.c.l.b16 %v499
    %v1166 = vunpack.c.h.b16 %v499
    %v1167 = vunpack.c.l.b16 %v500
    %v1168 = vunpack.c.h.b16 %v500
    %v1169 = vunpack.c.l.b16 %v501
    %v1170 = vunpack.c.h.b16 %v501
    %v1171 = vunpack.c.l.b16 %v502
    %v1172 = vunpack.c.l.b16 %v503
    %v1173 = vunpack.c.h.b16 %v503
    %v1174 = vunpack.c.l.b16 %v504
    %v1175 = vunpack.c.h.b16 %v504
    %v1176 = vunpack.c.l.b16 %v505
    %v1177 = vunpack.c.h.b16 %v505
    %v1178 = vunpack.c.l.b16 %v506
    %v1179 = vunpack.c.l.b16 %v507
    %v1180 = vunpack.c.h.b16 %v507
    %v1181 = vunpack.c.l.b16 %v508
    %v1182 = vunpack.c.h.b16 %v508
    %v1183 = vunpack.c.l.b16 %v509
    %v1184 = vunpack.c.h.b16 %v509
    %v1185 = vunpack.c.l.b16 %v510
    %v1186 = vunpack.c.l.b16 %v511
    %v1187 = vunpack.c.h.b16 %v511
    %v1188 = vunpack.c.l.b16 %v512
    %v1189 = vunpack.c.h.b16 %v512
    %v1190 = vunpack.c.l.b16 %v513
    %v1191 = vunpack.c.h.b16 %v513
    %v1192 = vunpack.c.l.b16 %v514
    %v1193 = vunpack.c.l.b16 %v515
    %v1194 = vunpack.c.h.b16 %v515
    %v1195 = vunpack.c.l.b16 %v516
    %v1196 = vunpack.c.h.b16 %v516
    %v1197 = vunpack.c.l.b16 %v517
    %v1198 = vunpack.c.h.b16 %v517
    %v1199 = vunpack.c.l.b16 %v518
    %v1200 = vunpack.c.l.b16 %v519
    %v1201 = vunpack.c.h.b16 %v519
    %v1202 = vunpack.c.l.b16 %v520
    %v1203 = vunpack.c.h.b16 %v520
    %v1204 = vunpack.c.l.b16 %v521
    %v1205 = vunpack.c.h.b16 %v521
    %v1206 = vunpack.c.l.b16 %v522
    %v1207 = vunpack.c.l.b16 %v523
    %v1208 = vunpack.c.h.b16 %v523
    %v1209 = vunpack.c.l.b16 %v524
    %v1210 = vunpack.c.h.b16 %v524
    %v1211 = vunpack.c.l.b16 %v525
    %v1212 = vunpack.c.h.b16 %v525
    %v1213 = vunpack.c.l.b16 %v526
    %v1214 = vunpack.c.l.b16 %v527
    %v1215 = vunpack.c.h.b16 %v527
    %v1216 = vunpack.c.l.b16 %v528
    %v1217 = vunpack.c.h.b16 %v528
    %v1218 = vunpack.c.l.b16 %v529
    %v1219 = vunpack.c.h.b16 %v529
    %v1220 = vunpack.c.l.b16 %v530
    %v1221 = vunpack.c.l.b16 %v531
    %v1222 = vunpack.c.h.b16 %v531
    %v1223 = vunpack.c.l.b16 %v532
    %v1224 = vunpack.c.h.b16 %v532
    %v1225 = vunpack.c.l.b16 %v533
    %v1226 = vunpack.c.h.b16 %v533
    %v1227 = vunpack.c.l.b16 %v534
    %v1228 = vunpack.c.l.b16 %v535
    %v1229 = vunpack.c.h.b16 %v535
    %v1230 = vunpack.c.l.b16 %v536
    %v1231 = vunpack.c.h.b16 %v536
    %v1232 = vunpack.c.l.b16 %v537
    %v1233 = vunpack.c.h.b16 %v537
    %v1234 = vunpack.c.l.b16 %v538
    %v1235 = vunpack.c.l.b16 %v539
    %v1236 = vunpack.c.h.b16 %v539
    %v1237 = vunpack.c.l.b16 %v540
    %v1238 = vunpack.c.h.b16 %v540
    %v1239 = vunpack.c.l.b16 %v541
    %v1240 = vunpack.c.h.b16 %v541
    %v1241 = vunpack.c.l.b16 %v542
    %v1242 = vunpack.c.l.b16 %v543
    %v1243 = vunpack.c.h.b16 %v543
    %v1244 = vunpack.c.l.b16 %v544
    %v1245 = vunpack.c.h.b16 %v544
    %v1246 = vunpack.c.l.b16 %v545
    %v1247 = vunpack.c.h.b16 %v545
    %v1248 = vunpack.c.l.b16 %v546
    %v1249 = vunpack.c.l.b16 %v547
    %v1250 = vunpack.c.h.b16 %v547
    %v1251 = vunpack.c.l.b16 %v548
    %v1252 = vunpack.c.h.b16 %v548
    %v1253 = vunpack.c.l.b16 %v549
    %v1254 = vunpack.c.h.b16 %v549
    %v1255 = vunpack.c.l.b16 %v550
    %v1256 = vunpack.c.l.b16 %v551
    %v1257 = vunpack.c.h.b16 %v551
    %v1258 = vunpack.c.l.b16 %v552
    %v1259 = vunpack.c.h.b16 %v552
    %v1260 = vunpack.c.l.b16 %v553
    %v1261 = vunpack.c.h.b16 %v553
    %v1262 = vunpack.c.l.b16 %v554
    %v1263 = vunpack.c.l.b16 %v555
    %v1264 = vunpack.c.h.b16 %v555
    %v1265 = vunpack.c.l.b16 %v556
    %v1266 = vunpack.c.h.b16 %v556
    %v1267 = vunpack.c.l.b16 %v557
    %v1268 = vunpack.c.h.b16 %v557
    %v1269 = vunpack.c.l.b16 %v558
    %v1270 = vunpack.c.l.b16 %v559
    %v1271 = vunpack.c.h.b16 %v559
    %v1272 = vunpack.c.l.b16 %v560
    %v1273 = vunpack.c.h.b16 %v560
    %v1274 = vunpack.c.l.b16 %v561
    %v1275 = vunpack.c.h.b16 %v561
    %v1276 = vunpack.c.l.b16 %v562
    %v1277 = vunpack.c.l.b16 %v563
    %v1278 = vunpack.c.h.b16 %v563
    %v1279 = vunpack.c.l.b16 %v564
    %v1280 = vunpack.c.h.b16 %v564
    %v1281 = vunpack.c.l.b16 %v565
    %v1282 = vunpack.c.h.b16 %v565
    %v1283 = vunpack.c.l.b16 %v566
    %v1284 = vunpack.c.l.b16 %v567
    %v1285 = vunpack.c.h.b16 %v567
    %v1286 = vunpack.c.l.b16 %v568
    %v1287 = vunpack.c.h.b16 %v568
    %v1288 = vunpack.c.l.b16 %v569
    %v1289 = vunpack.c.h.b16 %v569
    %v1290 = vunpack.c.l.b16 %v570
    %v1291 = vpack.c.b16 %v850, %v843
    %v1292 = vpack.c.b16 %v851, %v844
    %v1293 = vpack.c.b16 %v852, %v845
    %v1294 = vpack.c.b16 %v853, %v846
    %v1295 = vpack.c.b16 %v854, %v847
    %v1296 = vpack.c.b16 %v855, %v848
    %v1297 = vpack.c.b16 %v856, %v849
    %v1298 = vpack.c.b16 %v864, %v857
    %v1299 = vpack.c.b16 %v865, %v858
    %v1300 = vpack.c.b16 %v866, %v859
    %v1301 = vpack.c.b16 %v867, %v860
    %v1302 = vpack.c.b16 %v868, %v861
    %v1303 = vpack.c.b16 %v869, %v862
    %v1304 = vpack.c.b16 %v870, %v863
    %v1305 = vpack.c.b16 %v878, %v871
    %v1306 = vpack.c.b16 %v879, %v872
    %v1307 = vpack.c.b16 %v880, %v873
    %v1308 = vpack.c.b16 %v881, %v874
    %v1309 = vpack.c.b16 %v882, %v875
    %v1310 = vpack.c.b16 %v883, %v876
    %v1311 = vpack.c.b16 %v884, %v877
    %v1312 = vpack.c.b16 %v892, %v885
    %v1313 = vpack.c.b16 %v893, %v886
    %v1314 = vpack.c.b16 %v894, %v887
    %v1315 = vpack.c.b16 %v895, %v888
    %v1316 = vpack.c.b16 %v896, %v889
    %v1317 = vpack.c.b16 %v897, %v890
    %v1318 = vpack.c.b16 %v898, %v891
    %v1319 = vpack.c.b16 %v906, %v899
    %v1320 = vpack.c.b16 %v907, %v900
    %v1321 = vpack.c.b16 %v908, %v901
    %v1322 = vpack.c.b16 %v909, %v902
    %v1323 = vpack.c.b16 %v910, %v903
    %v1324 = vpack.c.b16 %v911, %v904
    %v1325 = vpack.c.b16 %v912, %v905
    %v1326 = vpack.c.b16 %v920, %v913
    %v1327 = vpack.c.b16 %v921, %v914
    %v1328 = vpack.c.b16 %v922, %v915
    %v1329 = vpack.c.b16 %v923, %v916
    %v1330 = vpack.c.b16 %v924, %v917
    %v1331 = vpack.c.b16 %v925, %v918
    %v1332 = vpack.c.b16 %v926, %v919
    %v1333 = vpack.c.b16 %v934, %v927
    %v1334 = vpack.c.b16 %v935, %v928
    %v1335 = vpack.c.b16 %v936, %v929
    %v1336 = vpack.c.b16 %v937, %v930
    %v1337 = vpack.c.b16 %v938, %v931
    %v1338 = vpack.c.b16 %v939, %v932
    %v1339 = vpack.c.b16 %v940, %v933
    %v1340 = vpack.c.b16 %v948, %v941
    %v1341 = vpack.c.b16 %v949, %v942
    %v1342 = vpack.c.b16 %v950, %v943
    %v1343 = vpack.c.b16 %v951, %v944
    %v1344 = vpack.c.b16 %v952, %v945
    %v1345 = vpack.c.b16 %v953, %v946
    %v1346 = vpack.c.b16 %v954, %v947
    %v1347 = vpack.c.b16 %v962, %v955
    %v1348 = vpack.c.b16 %v963, %v956
    %v1349 = vpack.c.b16 %v964, %v957
    %v1350 = vpack.c.b16 %v965, %v958
    %v1351 = vpack.c.b16 %v966, %v959
    %v1352 = vpack.c.b16 %v967, %v960
    %v1353 = vpack.c.b16 %v968, %v961
    %v1354 = vpack.c.b16 %v976, %v969
    %v1355 = vpack.c.b16 %v977, %v970
    %v1356 = vpack.c.b16 %v978, %v971
    %v1357 = vpack.c.b16 %v979, %v972
    %v1358 = vpack.c.b16 %v980, %v973
    %v1359 = vpack.c.b16 %v981, %v974
    %v1360 = vpack.c.b16 %v982, %v975
    %v1361 = vpack.c.b16 %v990, %v983
    %v1362 = vpack.c.b16 %v991, %v984
    %v1363 = vpack.c.b16 %v992, %v985
    %v1364 = vpack.c.b16 %v993, %v986
    %v1365 = vpack.c.b16 %v994, %v987
    %v1366 = vpack.c.b16 %v995, %v988
    %v1367 = vpack.c.b16 %v996, %v989
    %v1368 = vpack.c.b16 %v1004, %v997
    %v1369 = vpack.c.b16 %v1005, %v998
    %v1370 = vpack.c.b16 %v1006, %v999
    %v1371 = vpack.c.b16 %v1007, %v1000
    %v1372 = vpack.c.b16 %v1008, %v1001
    %v1373 = vpack.c.b16 %v1009, %v1002
    %v1374 = vpack.c.b16 %v1010, %v1003
    %v1375 = vpack.c.b16 %v1018, %v1011
    %v1376 = vpack.c.b16 %v1019, %v1012
    %v1377 = vpack.c.b16 %v1020, %v1013
    %v1378 = vpack.c.b16 %v1021, %v1014
    %v1379 = vpack.c.b16 %v1022, %v1015
    %v1380 = vpack.c.b16 %v1023, %v1016
    %v1381 = vpack.c.b16 %v1024, %v1017
    %v1382 = vpack.c.b16 %v1032, %v1025
    %v1383 = vpack.c.b16 %v1033, %v1026
    %v1384 = vpack.c.b16 %v1034, %v1027
    %v1385 = vpack.c.b16 %v1035, %v1028
    %v1386 = vpack.c.b16 %v1036, %v1029
    %v1387 = vpack.c.b16 %v1037, %v1030
    %v1388 = vpack.c.b16 %v1038, %v1031
    %v1389 = vpack.c.b16 %v1046, %v1039
    %v1390 = vpack.c.b16 %v1047, %v1040
    %v1391 = vpack.c.b16 %v1048, %v1041
    %v1392 = vpack.c.b16 %v1049, %v1042
    %v1393 = vpack.c.b16 %v1050, %v1043
    %v1394 = vpack.c.b16 %v1051, %v1044
    %v1395 = vpack.c.b16 %v1052, %v1045
    %v1396 = vpack.c.b16 %v1060, %v1053
    %v1397 = vpack.c.b16 %v1061, %v1054
    %v1398 = vpack.c.b16 %v1062, %v1055
    %v1399 = vpack.c.b16 %v1063, %v1056
    %v1400 = vpack.c.b16 %v1064, %v1057
    %v1401 = vpack.c.b16 %v1065, %v1058
    %v1402 = vpack.c.b16 %v1066, %v1059
    %v1403 = vpack.c.b16 %v1074, %v1067
    %v1404 = vpack.c.b16 %v1075, %v1068
    %v1405 = vpack.c.b16 %v1076, %v1069
    %v1406 = vpack.c.b16 %v1077, %v1070
    %v1407 = vpack.c.b16 %v1078, %v1071
    %v1408 = vpack.c.b16 %v1079, %v1072
    %v1409 = vpack.c.b16 %v1080, %v1073
    %v1410 = vpack.c.b16 %v1088, %v1081
    %v1411 = vpack.c.b16 %v1089, %v1082
    %v1412 = vpack.c.b16 %v1090, %v1083
    %v1413 = vpack.c.b16 %v1091, %v1084
    %v1414 = vpack.c.b16 %v1092, %v1085
    %v1415 = vpack.c.b16 %v1093, %v1086
    %v1416 = vpack.c.b16 %v1094, %v1087
    %v1417 = vpack.c.b16 %v1102, %v1095
    %v1418 = vpack.c.b16 %v1103, %v1096
    %v1419 = vpack.c.b16 %v1104, %v1097
    %v1420 = vpack.c.b16 %v1105, %v1098
    %v1421 = vpack.c.b16 %v1106, %v1099
    %v1422 = vpack.c.b16 %v1107, %v1100
    %v1423 = vpack.c.b16 %v1108, %v1101
    %v1424 = vpack.c.b16 %v1116, %v1109
    %v1425 = vpack.c.b16 %v1117, %v1110
    %v1426 = vpack.c.b16 %v1118, %v1111
    %v1427 = vpack.c.b16 %v1119, %v1112
    %v1428 = vpack.c.b16 %v1120, %v1113
    %v1429 = vpack.c.b16 %v1121, %v1114
    %v1430 = vpack.c.b16 %v1122, %v1115
    %v1431 = vpack.c.b16 %v1130, %v1123
    %v1432 = vpack.c.b16 %v1131, %v1124
    %v1433 = vpack.c.b16 %v1132, %v1125
    %v1434 = vpack.c.b16 %v1133, %v1126
    %v1435 = vpack.c.b16 %v1134, %v1127
    %v1436 = vpack.c.b16 %v1135, %v1128
    %v1437 = vpack.c.b16 %v1136, %v1129
    %v1438 = vpack.c.b16 %v1144, %v1137
    %v1439 = vpack.c.b16 %v1145, %v1138
    %v1440 = vpack.c.b16 %v1146, %v1139
    %v1441 = vpack.c.b16 %v1147, %v1140
    %v1442 = vpack.c.b16 %v1148, %v1141
    %v1443 = vpack.c.b16 %v1149, %v1142
    %v1444 = vpack.c.b16 %v1150, %v1143
    %v1445 = vpack.c.b16 %v1158, %v1151
    %v1446 = vpack.c.b16 %v1159, %v1152
    %v1447 = vpack.c.b16 %v1160, %v1153
    %v1448 = vpack.c.b16 %v1161, %v1154
    %v1449 = vpack.c.b16 %v1162, %v1155
    %v1450 = vpack.c.b16 %v1163, %v1156
    %v1451 = vpack.c.b16 %v1164, %v1157
    %v1452 = vpack.c.b16 %v1172, %v1165
    %v1453 = vpack.c.b16 %v1173, %v1166
    %v1454 = vpack.c.b16 %v1174, %v1167
    %v1455 = vpack.c.b16 %v1175, %v1168
    %v1456 = vpack.c.b16 %v1176, %v1169
    %v1457 = vpack.c.b16 %v1177, %v1170
    %v1458 = vpack.c.b16 %v1178, %v1171
    %v1459 = vpack.c.b16 %v1186, %v1179
    %v1460 = vpack.c.b16 %v1187, %v1180
    %v1461 = vpack.c.b16 %v1188, %v1181
    %v1462 = vpack.c.b16 %v1189, %v1182
    %v1463 = vpack.c.b16 %v1190, %v1183
    %v1464 = vpack.c.b16 %v1191, %v1184
    %v1465 = vpack.c.b16 %v1192, %v1185
    %v1466 = vpack.c.b16 %v1200, %v1193
    %v1467 = vpack.c.b16 %v1201, %v1194
    %v1468 = vpack.c.b16 %v1202, %v1195
    %v1469 = vpack.c.b16 %v1203, %v1196
    %v1470 = vpack.c.b16 %v1204, %v1197
    %v1471 = vpack.c.b16 %v1205, %v1198
    %v1472 = vpack.c.b16 %v1206, %v1199
    %v1473 = vpack.c.b16 %v1214, %v1207
    %v1474 = vpack.c.b16 %v1215, %v1208
    %v1475 = vpack.c.b16 %v1216, %v1209
    %v1476 = vpack.c.b16 %v1217, %v1210
    %v1477 = vpack.c.b16 %v1218, %v1211
    %v1478 = vpack.c.b16 %v1219, %v1212
    %v1479 = vpack.c.b16 %v1220, %v1213
    %v1480 = vpack.c.b16 %v1228, %v1221
    %v1481 = vpack.c.b16 %v1229, %v1222
    %v1482 = vpack.c.b16 %v1230, %v1223
    %v1483 = vpack.c.b16 %v1231, %v1224
    %v1484 = vpack.c.b16 %v1232, %v1225
    %v1485 = vpack.c.b16 %v1233, %v1226
    %v1486 = vpack.c.b16 %v1234, %v1227
    %v1487 = vpack.c.b16 %v1242, %v1235
    %v1488 = vpack.c.b16 %v1243, %v1236
    %v1489 = vpack.c.b16 %v1244, %v1237
    %v1490 = vpack.c.b16 %v1245, %v1238
    %v1491 = vpack.c.b16 %v1246, %v1239
    %v1492 = vpack.c.b16 %v1247, %v1240
    %v1493 = vpack.c.b16 %v1248, %v1241
    %v1494 = vpack.c.b16 %v1256, %v1249
    %v1495 = vpack.c.b16 %v1257, %v1250
    %v1496 = vpack.c.b16 %v1258, %v1251
    %v1497 = vpack.c.b16 %v1259, %v1252
    %v1498 = vpack.c.b16 %v1260, %v1253
    %v1499 = vpack.c.b16 %v1261, %v1254
    %v1500 = vpack.c.b16 %v1262, %v1255
    %v1501 = vpack.c.b16 %v1270, %v1263
    %v1502 = vpack.c.b16 %v1271, %v1264
    %v1503 = vpack.c.b16 %v1272, %v1265
    %v1504 = vpack.c.b16 %v1273, %v1266
    %v1505 = vpack.c.b16 %v1274, %v1267
    %v1506 = vpack.c.b16 %v1275, %v1268
    %v1507 = vpack.c.b16 %v1276, %v1269
    %v1508 = vpack.c.b16 %v1284, %v1277
    %v1509 = vpack.c.b16 %v1285, %v1278
    %v1510 = vpack.c.b16 %v1286, %v1279
    %v1511 = vpack.c.b16 %v1287, %v1280
    %v1512 = vpack.c.b16 %v1288, %v1281
    %v1513 = vpack.c.b16 %v1289, %v1282
    %v1514 = vpack.c.b16 %v1290, %v1283
    %1739 = vmatpush.bf16.msra.mxu0 %v1340
    %1740 = vmatpush.bf16.msra.mxu0 %v1333
    %1741 = vmatpush.bf16.msra.mxu0 %v1326
    %1742 = vmatpush.bf16.msra.mxu0 %v1319
    %1743 = vmatpush.bf16.msra.mxu0 %v1312
    %1744 = vmatpush.bf16.msra.mxu0 %v1305
    %1745 = vmatpush.bf16.msra.mxu0 %v1298
    %1746 = vmatpush.bf16.msra.mxu0 %v1291
    %1747 = vmatmul.bf16.gmra.mxu0 %v311
    %v1748 = vpop.f32.mrf.mxu0
    %v1749 = vadd.f32 %v573, %v1748
    %v1750 = vpop.f32.mrf.mxu0
    %1751 = vdwg.mxu0
    %1752 = vmatpush.bf16.msra.mxu0 %v1396
    %1753 = vmatpush.bf16.msra.mxu0 %v1389
    %1754 = vmatpush.bf16.msra.mxu0 %v1382
    %1755 = vmatpush.bf16.msra.mxu0 %v1375
    %1756 = vmatpush.bf16.msra.mxu0 %v1368
    %1757 = vmatpush.bf16.msra.mxu0 %v1361
    %1758 = vmatpush.bf16.msra.mxu0 %v1354
    %1759 = vmatpush.bf16.msra.mxu0 %v1347
    %1760 = vmatmul.bf16.gmra.mxu0 %v312
    %v1761 = vpop.f32.mrf.mxu0
    %v1762 = vadd.f32 %v1749, %v1761
    %v1763 = vpop.f32.mrf.mxu0
    %1764 = vdwg.mxu0
    %1765 = vmatpush.bf16.msra.mxu0 %v1452
    %1766 = vmatpush.bf16.msra.mxu0 %v1445
    %1767 = vmatpush.bf16.msra.mxu0 %v1438
    %1768 = vmatpush.bf16.msra.mxu0 %v1431
    %1769 = vmatpush.bf16.msra.mxu0 %v1424
    %1770 = vmatpush.bf16.msra.mxu0 %v1417
    %1771 = vmatpush.bf16.msra.mxu0 %v1410
    %1772 = vmatpush.bf16.msra.mxu0 %v1403
    %1773 = vmatmul.bf16.gmra.mxu0 %v313
    %v1774 = vpop.f32.mrf.mxu0
    %v1775 = vadd.f32 %v1762, %v1774
    %v1776 = vpop.f32.mrf.mxu0
    %1777 = vdwg.mxu0
    %1778 = vmatpush.bf16.msra.mxu0 %v1508
    %1779 = vmatpush.bf16.msra.mxu0 %v1501
    %1780 = vmatpush.bf16.msra.mxu0 %v1494
    %1781 = vmatpush.bf16.msra.mxu0 %v1487
    %1782 = vmatpush.bf16.msra.mxu0 %v1480
    %1783 = vmatpush.bf16.msra.mxu0 %v1473
    %1784 = vmatpush.bf16.msra.mxu0 %v1466
    %1785 = vmatpush.bf16.msra.mxu0 %v1459
    %1786 = vmatmul.bf16.gmra.mxu0 %v314
    %v1787 = vpop.f32.mrf.mxu0
    %v1788 = vadd.f32 %v1775, %v1787
    %v1789 = vpop.f32.mrf.mxu0
    %1790 = vdwg.mxu0
    %1791 = vmatpush.bf16.msra.mxu0 %v1341
    %1792 = vmatpush.bf16.msra.mxu0 %v1334
    %1793 = vmatpush.bf16.msra.mxu0 %v1327
    %1794 = vmatpush.bf16.msra.mxu0 %v1320
    %1795 = vmatpush.bf16.msra.mxu0 %v1313
    %1796 = vmatpush.bf16.msra.mxu0 %v1306
    %1797 = vmatpush.bf16.msra.mxu0 %v1299
    %1798 = vmatpush.bf16.msra.mxu0 %v1292
    %1799 = vmatmul.bf16.gmra.mxu0 %v311
    %v1800 = vpop.f32.mrf.mxu0
    %v1801 = vadd.f32 %v574, %v1800
    %v1802 = vpop.f32.mrf.mxu0
    %1803 = vdwg.mxu0
    %1804 = vmatpush.bf16.msra.mxu0 %v1397
    %1805 = vmatpush.bf16.msra.mxu0 %v1390
    %1806 = vmatpush.bf16.msra.mxu0 %v1383
    %1807 = vmatpush.bf16.msra.mxu0 %v1376
    %1808 = vmatpush.bf16.msra.mxu0 %v1369
    %1809 = vmatpush.bf16.msra.mxu0 %v1362
    %1810 = vmatpush.bf16.msra.mxu0 %v1355
    %1811 = vmatpush.bf16.msra.mxu0 %v1348
    %1812 = vmatmul.bf16.gmra.mxu0 %v312
    %v1813 = vpop.f32.mrf.mxu0
    %v1814 = vadd.f32 %v1801, %v1813
    %v1815 = vpop.f32.mrf.mxu0
    %1816 = vdwg.mxu0
    %1817 = vmatpush.bf16.msra.mxu0 %v1453
    %1818 = vmatpush.bf16.msra.mxu0 %v1446
    %1819 = vmatpush.bf16.msra.mxu0 %v1439
    %1820 = vmatpush.bf16.msra.mxu0 %v1432
    %1821 = vmatpush.bf16.msra.mxu0 %v1425
    %1822 = vmatpush.bf16.msra.mxu0 %v1418
    %1823 = vmatpush.bf16.msra.mxu0 %v1411
    %1824 = vmatpush.bf16.msra.mxu0 %v1404
    %1825 = vmatmul.bf16.gmra.mxu0 %v313
    %v1826 = vpop.f32.mrf.mxu0
    %v1827 = vadd.f32 %v1814, %v1826
    %v1828 = vpop.f32.mrf.mxu0
    %1829 = vdwg.mxu0
    %1830 = vmatpush.bf16.msra.mxu0 %v1509
    %1831 = vmatpush.bf16.msra.mxu0 %v1502
    %1832 = vmatpush.bf16.msra.mxu0 %v1495
    %1833 = vmatpush.bf16.msra.mxu0 %v1488
    %1834 = vmatpush.bf16.msra.mxu0 %v1481
    %1835 = vmatpush.bf16.msra.mxu0 %v1474
    %1836 = vmatpush.bf16.msra.mxu0 %v1467
    %1837 = vmatpush.bf16.msra.mxu0 %v1460
    %1838 = vmatmul.bf16.gmra.mxu0 %v314
    %v1839 = vpop.f32.mrf.mxu0
    %v1840 = vadd.f32 %v1827, %v1839
    %v1841 = vpop.f32.mrf.mxu0
    %1842 = vdwg.mxu0
    %1843 = vmatpush.bf16.msra.mxu0 %v1342
    %1844 = vmatpush.bf16.msra.mxu0 %v1335
    %1845 = vmatpush.bf16.msra.mxu0 %v1328
    %1846 = vmatpush.bf16.msra.mxu0 %v1321
    %1847 = vmatpush.bf16.msra.mxu0 %v1314
    %1848 = vmatpush.bf16.msra.mxu0 %v1307
    %1849 = vmatpush.bf16.msra.mxu0 %v1300
    %1850 = vmatpush.bf16.msra.mxu0 %v1293
    %1851 = vmatmul.bf16.gmra.mxu0 %v311
    %v1852 = vpop.f32.mrf.mxu0
    %v1853 = vadd.f32 %v575, %v1852
    %v1854 = vpop.f32.mrf.mxu0
    %1855 = vdwg.mxu0
    %1856 = vmatpush.bf16.msra.mxu0 %v1398
    %1857 = vmatpush.bf16.msra.mxu0 %v1391
    %1858 = vmatpush.bf16.msra.mxu0 %v1384
    %1859 = vmatpush.bf16.msra.mxu0 %v1377
    %1860 = vmatpush.bf16.msra.mxu0 %v1370
    %1861 = vmatpush.bf16.msra.mxu0 %v1363
    %1862 = vmatpush.bf16.msra.mxu0 %v1356
    %1863 = vmatpush.bf16.msra.mxu0 %v1349
    %1864 = vmatmul.bf16.gmra.mxu0 %v312
    %v1865 = vpop.f32.mrf.mxu0
    %v1866 = vadd.f32 %v1853, %v1865
    %v1867 = vpop.f32.mrf.mxu0
    %1868 = vdwg.mxu0
    %1869 = vmatpush.bf16.msra.mxu0 %v1454
    %1870 = vmatpush.bf16.msra.mxu0 %v1447
    %1871 = vmatpush.bf16.msra.mxu0 %v1440
    %1872 = vmatpush.bf16.msra.mxu0 %v1433
    %1873 = vmatpush.bf16.msra.mxu0 %v1426
    %1874 = vmatpush.bf16.msra.mxu0 %v1419
    %1875 = vmatpush.bf16.msra.mxu0 %v1412
    %1876 = vmatpush.bf16.msra.mxu0 %v1405
    %1877 = vmatmul.bf16.gmra.mxu0 %v313
    %v1878 = vpop.f32.mrf.mxu0
    %v1879 = vadd.f32 %v1866, %v1878
    %v1880 = vpop.f32.mrf.mxu0
    %1881 = vdwg.mxu0
    %1882 = vmatpush.bf16.msra.mxu0 %v1510
    %1883 = vmatpush.bf16.msra.mxu0 %v1503
    %1884 = vmatpush.bf16.msra.mxu0 %v1496
    %1885 = vmatpush.bf16.msra.mxu0 %v1489
    %1886 = vmatpush.bf16.msra.mxu0 %v1482
    %1887 = vmatpush.bf16.msra.mxu0 %v1475
    %1888 = vmatpush.bf16.msra.mxu0 %v1468
    %1889 = vmatpush.bf16.msra.mxu0 %v1461
    %1890 = vmatmul.bf16.gmra.mxu0 %v314
    %v1891 = vpop.f32.mrf.mxu0
    %v1892 = vadd.f32 %v1879, %v1891
    %v1893 = vpop.f32.mrf.mxu0
    %1894 = vdwg.mxu0
    %1895 = vmatpush.bf16.msra.mxu0 %v1343
    %1896 = vmatpush.bf16.msra.mxu0 %v1336
    %1897 = vmatpush.bf16.msra.mxu0 %v1329
    %1898 = vmatpush.bf16.msra.mxu0 %v1322
    %1899 = vmatpush.bf16.msra.mxu0 %v1315
    %1900 = vmatpush.bf16.msra.mxu0 %v1308
    %1901 = vmatpush.bf16.msra.mxu0 %v1301
    %1902 = vmatpush.bf16.msra.mxu0 %v1294
    %1903 = vmatmul.bf16.gmra.mxu0 %v311
    %v1904 = vpop.f32.mrf.mxu0
    %v1905 = vadd.f32 %v576, %v1904
    %v1906 = vpop.f32.mrf.mxu0
    %1907 = vdwg.mxu0
    %1908 = vmatpush.bf16.msra.mxu0 %v1399
    %1909 = vmatpush.bf16.msra.mxu0 %v1392
    %1910 = vmatpush.bf16.msra.mxu0 %v1385
    %1911 = vmatpush.bf16.msra.mxu0 %v1378
    %1912 = vmatpush.bf16.msra.mxu0 %v1371
    %1913 = vmatpush.bf16.msra.mxu0 %v1364
    %1914 = vmatpush.bf16.msra.mxu0 %v1357
    %1915 = vmatpush.bf16.msra.mxu0 %v1350
    %1916 = vmatmul.bf16.gmra.mxu0 %v312
    %v1917 = vpop.f32.mrf.mxu0
    %v1918 = vadd.f32 %v1905, %v1917
    %v1919 = vpop.f32.mrf.mxu0
    %1920 = vdwg.mxu0
    %1921 = vmatpush.bf16.msra.mxu0 %v1455
    %1922 = vmatpush.bf16.msra.mxu0 %v1448
    %1923 = vmatpush.bf16.msra.mxu0 %v1441
    %1924 = vmatpush.bf16.msra.mxu0 %v1434
    %1925 = vmatpush.bf16.msra.mxu0 %v1427
    %1926 = vmatpush.bf16.msra.mxu0 %v1420
    %1927 = vmatpush.bf16.msra.mxu0 %v1413
    %1928 = vmatpush.bf16.msra.mxu0 %v1406
    %1929 = vmatmul.bf16.gmra.mxu0 %v313
    %v1930 = vpop.f32.mrf.mxu0
    %v1931 = vadd.f32 %v1918, %v1930
    %v1932 = vpop.f32.mrf.mxu0
    %1933 = vdwg.mxu0
    %1934 = vmatpush.bf16.msra.mxu0 %v1511
    %1935 = vmatpush.bf16.msra.mxu0 %v1504
    %1936 = vmatpush.bf16.msra.mxu0 %v1497
    %1937 = vmatpush.bf16.msra.mxu0 %v1490
    %1938 = vmatpush.bf16.msra.mxu0 %v1483
    %1939 = vmatpush.bf16.msra.mxu0 %v1476
    %1940 = vmatpush.bf16.msra.mxu0 %v1469
    %1941 = vmatpush.bf16.msra.mxu0 %v1462
    %1942 = vmatmul.bf16.gmra.mxu0 %v314
    %v1943 = vpop.f32.mrf.mxu0
    %v1944 = vadd.f32 %v1931, %v1943
    %v1945 = vpop.f32.mrf.mxu0
    %1946 = vdwg.mxu0
    %1947 = vmatpush.bf16.msra.mxu0 %v1344
    %1948 = vmatpush.bf16.msra.mxu0 %v1337
    %1949 = vmatpush.bf16.msra.mxu0 %v1330
    %1950 = vmatpush.bf16.msra.mxu0 %v1323
    %1951 = vmatpush.bf16.msra.mxu0 %v1316
    %1952 = vmatpush.bf16.msra.mxu0 %v1309
    %1953 = vmatpush.bf16.msra.mxu0 %v1302
    %1954 = vmatpush.bf16.msra.mxu0 %v1295
    %1955 = vmatmul.bf16.gmra.mxu0 %v311
    %v1956 = vpop.f32.mrf.mxu0
    %v1957 = vadd.f32 %v577, %v1956
    %v1958 = vpop.f32.mrf.mxu0
    %1959 = vdwg.mxu0
    %1960 = vmatpush.bf16.msra.mxu0 %v1400
    %1961 = vmatpush.bf16.msra.mxu0 %v1393
    %1962 = vmatpush.bf16.msra.mxu0 %v1386
    %1963 = vmatpush.bf16.msra.mxu0 %v1379
    %1964 = vmatpush.bf16.msra.mxu0 %v1372
    %1965 = vmatpush.bf16.msra.mxu0 %v1365
    %1966 = vmatpush.bf16.msra.mxu0 %v1358
    %1967 = vmatpush.bf16.msra.mxu0 %v1351
    %1968 = vmatmul.bf16.gmra.mxu0 %v312
    %v1969 = vpop.f32.mrf.mxu0
    %v1970 = vadd.f32 %v1957, %v1969
    %v1971 = vpop.f32.mrf.mxu0
    %1972 = vdwg.mxu0
    %1973 = vmatpush.bf16.msra.mxu0 %v1456
    %1974 = vmatpush.bf16.msra.mxu0 %v1449
    %1975 = vmatpush.bf16.msra.mxu0 %v1442
    %1976 = vmatpush.bf16.msra.mxu0 %v1435
    %1977 = vmatpush.bf16.msra.mxu0 %v1428
    %1978 = vmatpush.bf16.msra.mxu0 %v1421
    %1979 = vmatpush.bf16.msra.mxu0 %v1414
    %1980 = vmatpush.bf16.msra.mxu0 %v1407
    %1981 = vmatmul.bf16.gmra.mxu0 %v313
    %v1982 = vpop.f32.mrf.mxu0
    %v1983 = vadd.f32 %v1970, %v1982
    %v1984 = vpop.f32.mrf.mxu0
    %1985 = vdwg.mxu0
    %1986 = vmatpush.bf16.msra.mxu0 %v1512
    %1987 = vmatpush.bf16.msra.mxu0 %v1505
    %1988 = vmatpush.bf16.msra.mxu0 %v1498
    %1989 = vmatpush.bf16.msra.mxu0 %v1491
    %1990 = vmatpush.bf16.msra.mxu0 %v1484
    %1991 = vmatpush.bf16.msra.mxu0 %v1477
    %1992 = vmatpush.bf16.msra.mxu0 %v1470
    %1993 = vmatpush.bf16.msra.mxu0 %v1463
    %1994 = vmatmul.bf16.gmra.mxu0 %v314
    %v1995 = vpop.f32.mrf.mxu0
    %v1996 = vadd.f32 %v1983, %v1995
    %v1997 = vpop.f32.mrf.mxu0
    %1998 = vdwg.mxu0
    %1999 = vmatpush.bf16.msra.mxu0 %v1345
    %2000 = vmatpush.bf16.msra.mxu0 %v1338
    %2001 = vmatpush.bf16.msra.mxu0 %v1331
    %2002 = vmatpush.bf16.msra.mxu0 %v1324
    %2003 = vmatpush.bf16.msra.mxu0 %v1317
    %2004 = vmatpush.bf16.msra.mxu0 %v1310
    %2005 = vmatpush.bf16.msra.mxu0 %v1303
    %2006 = vmatpush.bf16.msra.mxu0 %v1296
    %2007 = vmatmul.bf16.gmra.mxu0 %v311
    %v2008 = vpop.f32.mrf.mxu0
    %v2009 = vadd.f32 %v578, %v2008
    %v2010 = vpop.f32.mrf.mxu0
    %2011 = vdwg.mxu0
    %2012 = vmatpush.bf16.msra.mxu0 %v1401
    %2013 = vmatpush.bf16.msra.mxu0 %v1394
    %2014 = vmatpush.bf16.msra.mxu0 %v1387
    %2015 = vmatpush.bf16.msra.mxu0 %v1380
    %2016 = vmatpush.bf16.msra.mxu0 %v1373
    %2017 = vmatpush.bf16.msra.mxu0 %v1366
    %2018 = vmatpush.bf16.msra.mxu0 %v1359
    %2019 = vmatpush.bf16.msra.mxu0 %v1352
    %2020 = vmatmul.bf16.gmra.mxu0 %v312
    %v2021 = vpop.f32.mrf.mxu0
    %v2022 = vadd.f32 %v2009, %v2021
    %v2023 = vpop.f32.mrf.mxu0
    %2024 = vdwg.mxu0
    %2025 = vmatpush.bf16.msra.mxu0 %v1457
    %2026 = vmatpush.bf16.msra.mxu0 %v1450
    %2027 = vmatpush.bf16.msra.mxu0 %v1443
    %2028 = vmatpush.bf16.msra.mxu0 %v1436
    %2029 = vmatpush.bf16.msra.mxu0 %v1429
    %2030 = vmatpush.bf16.msra.mxu0 %v1422
    %2031 = vmatpush.bf16.msra.mxu0 %v1415
    %2032 = vmatpush.bf16.msra.mxu0 %v1408
    %2033 = vmatmul.bf16.gmra.mxu0 %v313
    %v2034 = vpop.f32.mrf.mxu0
    %v2035 = vadd.f32 %v2022, %v2034
    %v2036 = vpop.f32.mrf.mxu0
    %2037 = vdwg.mxu0
    %2038 = vmatpush.bf16.msra.mxu0 %v1513
    %2039 = vmatpush.bf16.msra.mxu0 %v1506
    %2040 = vmatpush.bf16.msra.mxu0 %v1499
    %2041 = vmatpush.bf16.msra.mxu0 %v1492
    %2042 = vmatpush.bf16.msra.mxu0 %v1485
    %2043 = vmatpush.bf16.msra.mxu0 %v1478
    %2044 = vmatpush.bf16.msra.mxu0 %v1471
    %2045 = vmatpush.bf16.msra.mxu0 %v1464
    %2046 = vmatmul.bf16.gmra.mxu0 %v314
    %v2047 = vpop.f32.mrf.mxu0
    %v2048 = vadd.f32 %v2035, %v2047
    %v2049 = vpop.f32.mrf.mxu0
    %2050 = vdwg.mxu0
    %2051 = vmatpush.bf16.msra.mxu0 %v1346
    %2052 = vmatpush.bf16.msra.mxu0 %v1339
    %2053 = vmatpush.bf16.msra.mxu0 %v1332
    %2054 = vmatpush.bf16.msra.mxu0 %v1325
    %2055 = vmatpush.bf16.msra.mxu0 %v1318
    %2056 = vmatpush.bf16.msra.mxu0 %v1311
    %2057 = vmatpush.bf16.msra.mxu0 %v1304
    %2058 = vmatpush.bf16.msra.mxu0 %v1297
    %2059 = vmatmul.bf16.gmra.mxu0 %v311
    %v2060 = vpop.f32.mrf.mxu0
    %v2061 = vadd.f32 %v579, %v2060
    %v2062 = vpop.f32.mrf.mxu0
    %2063 = vdwg.mxu0
    %2064 = vmatpush.bf16.msra.mxu0 %v1402
    %2065 = vmatpush.bf16.msra.mxu0 %v1395
    %2066 = vmatpush.bf16.msra.mxu0 %v1388
    %2067 = vmatpush.bf16.msra.mxu0 %v1381
    %2068 = vmatpush.bf16.msra.mxu0 %v1374
    %2069 = vmatpush.bf16.msra.mxu0 %v1367
    %2070 = vmatpush.bf16.msra.mxu0 %v1360
    %2071 = vmatpush.bf16.msra.mxu0 %v1353
    %2072 = vmatmul.bf16.gmra.mxu0 %v312
    %v2073 = vpop.f32.mrf.mxu0
    %v2074 = vadd.f32 %v2061, %v2073
    %v2075 = vpop.f32.mrf.mxu0
    %2076 = vdwg.mxu0
    %2077 = vmatpush.bf16.msra.mxu0 %v1458
    %2078 = vmatpush.bf16.msra.mxu0 %v1451
    %2079 = vmatpush.bf16.msra.mxu0 %v1444
    %2080 = vmatpush.bf16.msra.mxu0 %v1437
    %2081 = vmatpush.bf16.msra.mxu0 %v1430
    %2082 = vmatpush.bf16.msra.mxu0 %v1423
    %2083 = vmatpush.bf16.msra.mxu0 %v1416
    %2084 = vmatpush.bf16.msra.mxu0 %v1409
    %2085 = vmatmul.bf16.gmra.mxu0 %v313
    %v2086 = vpop.f32.mrf.mxu0
    %v2087 = vadd.f32 %v2074, %v2086
    %v2088 = vpop.f32.mrf.mxu0
    %2089 = vdwg.mxu0
    %2090 = vmatpush.bf16.msra.mxu0 %v1514
    %2091 = vmatpush.bf16.msra.mxu0 %v1507
    %2092 = vmatpush.bf16.msra.mxu0 %v1500
    %2093 = vmatpush.bf16.msra.mxu0 %v1493
    %2094 = vmatpush.bf16.msra.mxu0 %v1486
    %2095 = vmatpush.bf16.msra.mxu0 %v1479
    %2096 = vmatpush.bf16.msra.mxu0 %v1472
    %2097 = vmatpush.bf16.msra.mxu0 %v1465
    %2098 = vmatmul.bf16.gmra.mxu0 %v314
    %v2099 = vpop.f32.mrf.mxu0
    %v2100 = vadd.f32 %v2087, %v2099
    %v2101 = vpop.f32.mrf.mxu0
    %2102 = vdwg.mxu0
    %v2103 = vmul.f32 %v1788, 0.5
    %v2104 = vmul.f32 %v1840, 0.5
    %v2105 = vmul.f32 %v1892, 0.5
    %v2106 = vmul.f32 %v1944, 0.5
    %v2107 = vmul.f32 %v1996, 0.5
    %v2108 = vmul.f32 %v2048, 0.5
    %v2109 = vmul.f32 %v2100, 0.5
    %v2110 = vtanh.pop %v2103
    %v2111 = vtanh.pop %v2104
    %v2112 = vtanh.pop %v2105
    %v2113 = vtanh.pop %v2106
    %v2114 = vtanh.pop %v2107
    %v2115 = vtanh.pop %v2108
    %v2116 = vtanh.pop %v2109
    %v2117 = vmul.f32 %v2110, 0.5
    %v2118 = vmul.f32 %v2111, 0.5
    %v2119 = vmul.f32 %v2112, 0.5
    %v2120 = vmul.f32 %v2113, 0.5
    %v2121 = vmul.f32 %v2114, 0.5
    %v2122 = vmul.f32 %v2115, 0.5
    %v2123 = vmul.f32 %v2116, 0.5
    %v2124 = vadd.f32 %v2117, 0.5
    %v2125 = vadd.f32 %v2118, 0.5
    %v2126 = vadd.f32 %v2119, 0.5
    %v2127 = vadd.f32 %v2120, 0.5
    %v2128 = vadd.f32 %v2121, 0.5
    %v2129 = vadd.f32 %v2122, 0.5
    %v2130 = vadd.f32 %v2123, 0.5
    %2131 = vst [vmem:[%s5] sm:$0xff] %v2124
    %2132 = vst [vmem:[%s5 + $0x8] sm:$0xff] %v2125
    %2133 = vst [vmem:[%s5 + $0x10] sm:$0xff] %v2126
    %2134 = vst [vmem:[%s5 + $0x18] sm:$0xff] %v2127
    %2135 = vst [vmem:[%s5 + $0x20] sm:$0xff] %v2128
    %2136 = vst [vmem:[%s5 + $0x28] sm:$0xff] %v2129
    %vm2137 = vcmask 130048
    %2138 = vst.msk [vmem:[%s5 + $0x30] sm:$0xff] %vm2137, %v2130
    // Predicated region
    $region30: #{decoder_dense.1} parent=1 // pred_check
      _
    $region31: #{decoder_dense.1} parent=1 // pred_check_branch
      %2140 = sbr.rel (0) target = $region33
    $region32: #{decoder_dense.1} parent=1 // pred_region
      _
    $region33: #{decoder_dense.1} parent=1 // pred_fallthru
      _
    // Predicated region
    $region34: #{decoder_dense.1} parent=1 // pred_check
      _
    $region35: #{decoder_dense.1} parent=1 // pred_check_branch
      %2142 = sbr.rel (0) target = $region37
    $region36: #{decoder_dense.1} parent=1 // pred_region
      _
    $region37: #{decoder_dense.1} parent=1 // pred_fallthru
      _
    %2143 = vsyncpa [#allocation3], 1
    %2144 = vsyncpa [#allocation5], 1

</llo_original>
